<compile_context>
chip_gen: v7x
topology: tpu7x:2x2x1
jax: 0.10.0
libtpu: 0.0.40
codegen_flags: <defaults>
</compile_context>

<pallas_src>
import jax
import jax.numpy as jnp
from jax.experimental import pallas as pl
from jax.experimental.pallas import tpu as pltpu

LANE = 128     # lane width: pad every feature dim to a multiple of this
TILE_B = 128   # batch rows per grid step


def _round_up(x, m):
    return ((x + m - 1) // m) * m


def mlp_kernel(x_ref,
               w1, b1, w2, b2, w3, b3, w4, b4, w5, b5, w6, b6, w7, b7,
               out_ref):
    """Fused MLP forward on one (TILE_B, in_pad) batch tile.

    Weights are lane-padded bf16; biases are f32 (1, out_pad). Every matmul runs
    in bf16 on the MXU with f32 accumulation; activations stay f32 between
    layers. Zero padding of weights/biases keeps padded lanes exactly zero, so
    the padded math is identical to the unpadded math on the valid columns.
    """
    h = x_ref[...]  # (TILE_B, in_pad) f32

    def linear(h, w_ref, b_ref, relu):
        y = jnp.dot(h.astype(jnp.bfloat16), w_ref[...],
                    preferred_element_type=jnp.float32) + b_ref[...]
        return jnp.maximum(y, 0.0) if relu else y

    h = linear(h, w1, b1, True)    # dropout1 -> fc1 -> relu   (dropout = identity)
    h = linear(h, w2, b2, True)    # dropout2 -> fc2 -> relu
    h = linear(h, w3, b3, True)    # dropout3 -> fc3 -> relu
    h = linear(h, w4, b4, True)    # dropout4 -> fc4 -> relu
    h = linear(h, w5, b5, True)    # dropout3 -> fc5 -> relu
    h = linear(h, w6, b6, True)    # dropout2 -> fc6 -> relu
    out_ref[...] = linear(h, w7, b7, False)   # dropout1 -> fc7 (no relu)


def mlp_forward(x, params, *, tile_b=TILE_B):
    """params: list of (W, b); W is (in_features, out_features), b is (1, out) or (out,)."""
    B, in_features = x.shape
    num_classes = params[-1][0].shape[1]

    # Lane-pad batch and every feature dim.
    b_pad = _round_up(max(B, tile_b), tile_b)
    in_pad = _round_up(in_features, LANE)
    x_p = jnp.zeros((b_pad, in_pad), jnp.float32).at[:B, :in_features].set(x)

    flat_args = [x_p]
    in_specs = [pl.BlockSpec((tile_b, in_pad), lambda i: (i, 0))]
    for (w, b) in params:
        fi, fo = w.shape
        fi_p, fo_p = _round_up(fi, LANE), _round_up(fo, LANE)
        w_p = (jnp.zeros((fi_p, fo_p), jnp.float32)
               .at[:fi, :fo].set(w).astype(jnp.bfloat16))
        b_p = jnp.zeros((1, fo_p), jnp.float32).at[:, :fo].set(
            jnp.asarray(b, jnp.float32).reshape(1, -1))
        flat_args += [w_p, b_p]
        # Constant block index -> weights/biases stay VMEM-resident across batch tiles.
        in_specs += [pl.BlockSpec((fi_p, fo_p), lambda i: (0, 0)),
                     pl.BlockSpec((1, fo_p), lambda i: (0, 0))]

    out_pad = _round_up(num_classes, LANE)
    grid = (b_pad // tile_b,)

    out = pl.pallas_call(
        mlp_kernel,
        out_shape=jax.ShapeDtypeStruct((b_pad, out_pad), jnp.float32),
        grid=grid,
        in_specs=in_specs,
        out_specs=pl.BlockSpec((tile_b, out_pad), lambda i: (i, 0)),
        compiler_params=pltpu.CompilerParams(
            dimension_semantics=("parallel",),       # shards batch tiles across TCs on v7x
            vmem_limit_bytes=32 * 1024 * 1024),      # explicit budget; resident weights ~230 KiB
    )(*flat_args)

    return out[:B, :num_classes]


def init_params(key, layer_sizes):
    """Deterministic He-style init. Returns [(W_(in,out), b_(1,out)), ...]."""
    params = []
    for i in range(len(layer_sizes) - 1):
        fan_in, fan_out = layer_sizes[i], layer_sizes[i + 1]
        key, kw, kb = jax.random.split(key, 3)
        scale = (2.0 / fan_in) ** 0.5
        w = jax.random.normal(kw, (fan_in, fan_out), dtype=jnp.float32) * scale
        b = jax.random.normal(kb, (1, fan_out), dtype=jnp.float32) * 0.01
        params.append((w, b))
    return params


if __name__ == "__main__":
    # Shapes consistent with the module:
    #   input_size=32, f1..f6 = 64,128,64,64,128,32, num_classes=16, batch=256
    # (batch 256 -> grid=(2,) so the batch-tiled pipeline is actually exercised).
    batch = 256
    layer_sizes = [32, 64, 128, 64, 64, 128, 32, 16]

    key = jax.random.PRNGKey(0)
    key, kx = jax.random.split(key)
    x = jax.random.normal(kx, (batch, layer_sizes[0]), dtype=jnp.float32)
    params = init_params(key, layer_sizes)

    out = mlp_forward(x, params)
    out = jax.block_until_ready(out)
    assert out.shape == (batch, layer_sizes[-1])

    # Pure-JAX reference with the same bf16-matmul / f32-accumulate math
    # (dropout = identity in eval mode).
    h = x
    for i, (w, b) in enumerate(params):
        y = jnp.dot(h.astype(jnp.bfloat16), w.astype(jnp.bfloat16),
                    preferred_element_type=jnp.float32) + b.reshape(1, -1)
        h = jnp.maximum(y, 0.0) if i < len(params) - 1 else y

    assert jnp.allclose(out, h, atol=1e-2, rtol=1e-2), "mismatch vs reference"

    print("KERNEL_OK")
</pallas_src>

<mosaic_0001>
module attributes {stable_mosaic.version = 11 : i64} {
  func.func @mlp_kernel(%arg0: i32, %arg1: memref<128x128xf32, #tpu.memory_space<vmem>>, %arg2: memref<128x128xbf16, #tpu.memory_space<vmem>>, %arg3: memref<1x128xf32, #tpu.memory_space<vmem>>, %arg4: memref<128x128xbf16, #tpu.memory_space<vmem>>, %arg5: memref<1x128xf32, #tpu.memory_space<vmem>>, %arg6: memref<128x128xbf16, #tpu.memory_space<vmem>>, %arg7: memref<1x128xf32, #tpu.memory_space<vmem>>, %arg8: memref<128x128xbf16, #tpu.memory_space<vmem>>, %arg9: memref<1x128xf32, #tpu.memory_space<vmem>>, %arg10: memref<128x128xbf16, #tpu.memory_space<vmem>>, %arg11: memref<1x128xf32, #tpu.memory_space<vmem>>, %arg12: memref<128x128xbf16, #tpu.memory_space<vmem>>, %arg13: memref<1x128xf32, #tpu.memory_space<vmem>>, %arg14: memref<128x128xbf16, #tpu.memory_space<vmem>>, %arg15: memref<1x128xf32, #tpu.memory_space<vmem>>, %arg16: memref<128x128xf32, #tpu.memory_space<vmem>>) attributes {dimension_semantics = [#tpu.dimension_semantics<parallel>], iteration_bounds = array<i64: 2>, scalar_prefetch = 0 : i64, scratch_operands = 0 : i64, tpu.core_type = #tpu.core_type<tc>, window_params = [{transform_indices = @transform_0, window_bounds = array<i64: 128, 128>}, {pipeline_mode = #tpu.pipeline_mode<synchronous>, transform_indices = @transform_1, window_bounds = array<i64: 128, 128>}, {pipeline_mode = #tpu.pipeline_mode<synchronous>, transform_indices = @transform_2, window_bounds = array<i64: 1, 128>}, {pipeline_mode = #tpu.pipeline_mode<synchronous>, transform_indices = @transform_3, window_bounds = array<i64: 128, 128>}, {pipeline_mode = #tpu.pipeline_mode<synchronous>, transform_indices = @transform_4, window_bounds = array<i64: 1, 128>}, {pipeline_mode = #tpu.pipeline_mode<synchronous>, transform_indices = @transform_5, window_bounds = array<i64: 128, 128>}, {pipeline_mode = #tpu.pipeline_mode<synchronous>, transform_indices = @transform_6, window_bounds = array<i64: 1, 128>}, {pipeline_mode = #tpu.pipeline_mode<synchronous>, transform_indices = @transform_7, window_bounds = array<i64: 128, 128>}, {pipeline_mode = #tpu.pipeline_mode<synchronous>, transform_indices = @transform_8, window_bounds = array<i64: 1, 128>}, {pipeline_mode = #tpu.pipeline_mode<synchronous>, transform_indices = @transform_9, window_bounds = array<i64: 128, 128>}, {pipeline_mode = #tpu.pipeline_mode<synchronous>, transform_indices = @transform_10, window_bounds = array<i64: 1, 128>}, {pipeline_mode = #tpu.pipeline_mode<synchronous>, transform_indices = @transform_11, window_bounds = array<i64: 128, 128>}, {pipeline_mode = #tpu.pipeline_mode<synchronous>, transform_indices = @transform_12, window_bounds = array<i64: 1, 128>}, {pipeline_mode = #tpu.pipeline_mode<synchronous>, transform_indices = @transform_13, window_bounds = array<i64: 128, 128>}, {pipeline_mode = #tpu.pipeline_mode<synchronous>, transform_indices = @transform_14, window_bounds = array<i64: 1, 128>}, {transform_indices = @transform_15, window_bounds = array<i64: 128, 128>}]} {
    %c0 = arith.constant 0 : index
    %c0_0 = arith.constant 0 : index
    %0 = vector.load %arg1[%c0, %c0_0] : memref<128x128xf32, #tpu.memory_space<vmem>>, vector<128x128xf32>
    %1 = arith.truncf %0 : vector<128x128xf32> to vector<128x128xbf16>
    %c0_1 = arith.constant 0 : index
    %c0_2 = arith.constant 0 : index
    %2 = vector.load %arg2[%c0_1, %c0_2] : memref<128x128xbf16, #tpu.memory_space<vmem>>, vector<128x128xbf16>
    %cst = arith.constant dense<0.000000e+00> : vector<128x128xf32>
    %3 = tpu.matmul %1, %2, %cst {dimension_numbers = #tpu.dot_dimension_numbers<[1], [0], [0], [1], [0, 0, 1, 1], [], []>} : vector<128x128xbf16>, vector<128x128xbf16>, vector<128x128xf32> -> vector<128x128xf32>
    %c0_3 = arith.constant 0 : index
    %c0_4 = arith.constant 0 : index
    %4 = vector.load %arg3[%c0_3, %c0_4] : memref<1x128xf32, #tpu.memory_space<vmem>>, vector<1x128xf32>
    %5 = vector.broadcast %4 : vector<1x128xf32> to vector<128x128xf32>
    %6 = arith.addf %3, %5 : vector<128x128xf32>
    %cst_5 = arith.constant 0.000000e+00 : f32
    %7 = vector.broadcast %cst_5 : f32 to vector<128x128xf32>
    %8 = arith.maximumf %6, %7 : vector<128x128xf32>
    %9 = arith.truncf %8 : vector<128x128xf32> to vector<128x128xbf16>
    %c0_6 = arith.constant 0 : index
    %c0_7 = arith.constant 0 : index
    %10 = vector.load %arg4[%c0_6, %c0_7] : memref<128x128xbf16, #tpu.memory_space<vmem>>, vector<128x128xbf16>
    %cst_8 = arith.constant dense<0.000000e+00> : vector<128x128xf32>
    %11 = tpu.matmul %9, %10, %cst_8 {dimension_numbers = #tpu.dot_dimension_numbers<[1], [0], [0], [1], [0, 0, 1, 1], [], []>} : vector<128x128xbf16>, vector<128x128xbf16>, vector<128x128xf32> -> vector<128x128xf32>
    %c0_9 = arith.constant 0 : index
    %c0_10 = arith.constant 0 : index
    %12 = vector.load %arg5[%c0_9, %c0_10] : memref<1x128xf32, #tpu.memory_space<vmem>>, vector<1x128xf32>
    %13 = vector.broadcast %12 : vector<1x128xf32> to vector<128x128xf32>
    %14 = arith.addf %11, %13 : vector<128x128xf32>
    %cst_11 = arith.constant 0.000000e+00 : f32
    %15 = vector.broadcast %cst_11 : f32 to vector<128x128xf32>
    %16 = arith.maximumf %14, %15 : vector<128x128xf32>
    %17 = arith.truncf %16 : vector<128x128xf32> to vector<128x128xbf16>
    %c0_12 = arith.constant 0 : index
    %c0_13 = arith.constant 0 : index
    %18 = vector.load %arg6[%c0_12, %c0_13] : memref<128x128xbf16, #tpu.memory_space<vmem>>, vector<128x128xbf16>
    %cst_14 = arith.constant dense<0.000000e+00> : vector<128x128xf32>
    %19 = tpu.matmul %17, %18, %cst_14 {dimension_numbers = #tpu.dot_dimension_numbers<[1], [0], [0], [1], [0, 0, 1, 1], [], []>} : vector<128x128xbf16>, vector<128x128xbf16>, vector<128x128xf32> -> vector<128x128xf32>
    %c0_15 = arith.constant 0 : index
    %c0_16 = arith.constant 0 : index
    %20 = vector.load %arg7[%c0_15, %c0_16] : memref<1x128xf32, #tpu.memory_space<vmem>>, vector<1x128xf32>
    %21 = vector.broadcast %20 : vector<1x128xf32> to vector<128x128xf32>
    %22 = arith.addf %19, %21 : vector<128x128xf32>
    %cst_17 = arith.constant 0.000000e+00 : f32
    %23 = vector.broadcast %cst_17 : f32 to vector<128x128xf32>
    %24 = arith.maximumf %22, %23 : vector<128x128xf32>
    %25 = arith.truncf %24 : vector<128x128xf32> to vector<128x128xbf16>
    %c0_18 = arith.constant 0 : index
    %c0_19 = arith.constant 0 : index
    %26 = vector.load %arg8[%c0_18, %c0_19] : memref<128x128xbf16, #tpu.memory_space<vmem>>, vector<128x128xbf16>
    %cst_20 = arith.constant dense<0.000000e+00> : vector<128x128xf32>
    %27 = tpu.matmul %25, %26, %cst_20 {dimension_numbers = #tpu.dot_dimension_numbers<[1], [0], [0], [1], [0, 0, 1, 1], [], []>} : vector<128x128xbf16>, vector<128x128xbf16>, vector<128x128xf32> -> vector<128x128xf32>
    %c0_21 = arith.constant 0 : index
    %c0_22 = arith.constant 0 : index
    %28 = vector.load %arg9[%c0_21, %c0_22] : memref<1x128xf32, #tpu.memory_space<vmem>>, vector<1x128xf32>
    %29 = vector.broadcast %28 : vector<1x128xf32> to vector<128x128xf32>
    %30 = arith.addf %27, %29 : vector<128x128xf32>
    %cst_23 = arith.constant 0.000000e+00 : f32
    %31 = vector.broadcast %cst_23 : f32 to vector<128x128xf32>
    %32 = arith.maximumf %30, %31 : vector<128x128xf32>
    %33 = arith.truncf %32 : vector<128x128xf32> to vector<128x128xbf16>
    %c0_24 = arith.constant 0 : index
    %c0_25 = arith.constant 0 : index
    %34 = vector.load %arg10[%c0_24, %c0_25] : memref<128x128xbf16, #tpu.memory_space<vmem>>, vector<128x128xbf16>
    %cst_26 = arith.constant dense<0.000000e+00> : vector<128x128xf32>
    %35 = tpu.matmul %33, %34, %cst_26 {dimension_numbers = #tpu.dot_dimension_numbers<[1], [0], [0], [1], [0, 0, 1, 1], [], []>} : vector<128x128xbf16>, vector<128x128xbf16>, vector<128x128xf32> -> vector<128x128xf32>
    %c0_27 = arith.constant 0 : index
    %c0_28 = arith.constant 0 : index
    %36 = vector.load %arg11[%c0_27, %c0_28] : memref<1x128xf32, #tpu.memory_space<vmem>>, vector<1x128xf32>
    %37 = vector.broadcast %36 : vector<1x128xf32> to vector<128x128xf32>
    %38 = arith.addf %35, %37 : vector<128x128xf32>
    %cst_29 = arith.constant 0.000000e+00 : f32
    %39 = vector.broadcast %cst_29 : f32 to vector<128x128xf32>
    %40 = arith.maximumf %38, %39 : vector<128x128xf32>
    %41 = arith.truncf %40 : vector<128x128xf32> to vector<128x128xbf16>
    %c0_30 = arith.constant 0 : index
    %c0_31 = arith.constant 0 : index
    %42 = vector.load %arg12[%c0_30, %c0_31] : memref<128x128xbf16, #tpu.memory_space<vmem>>, vector<128x128xbf16>
    %cst_32 = arith.constant dense<0.000000e+00> : vector<128x128xf32>
    %43 = tpu.matmul %41, %42, %cst_32 {dimension_numbers = #tpu.dot_dimension_numbers<[1], [0], [0], [1], [0, 0, 1, 1], [], []>} : vector<128x128xbf16>, vector<128x128xbf16>, vector<128x128xf32> -> vector<128x128xf32>
    %c0_33 = arith.constant 0 : index
    %c0_34 = arith.constant 0 : index
    %44 = vector.load %arg13[%c0_33, %c0_34] : memref<1x128xf32, #tpu.memory_space<vmem>>, vector<1x128xf32>
    %45 = vector.broadcast %44 : vector<1x128xf32> to vector<128x128xf32>
    %46 = arith.addf %43, %45 : vector<128x128xf32>
    %cst_35 = arith.constant 0.000000e+00 : f32
    %47 = vector.broadcast %cst_35 : f32 to vector<128x128xf32>
    %48 = arith.maximumf %46, %47 : vector<128x128xf32>
    %49 = arith.truncf %48 : vector<128x128xf32> to vector<128x128xbf16>
    %c0_36 = arith.constant 0 : index
    %c0_37 = arith.constant 0 : index
    %50 = vector.load %arg14[%c0_36, %c0_37] : memref<128x128xbf16, #tpu.memory_space<vmem>>, vector<128x128xbf16>
    %cst_38 = arith.constant dense<0.000000e+00> : vector<128x128xf32>
    %51 = tpu.matmul %49, %50, %cst_38 {dimension_numbers = #tpu.dot_dimension_numbers<[1], [0], [0], [1], [0, 0, 1, 1], [], []>} : vector<128x128xbf16>, vector<128x128xbf16>, vector<128x128xf32> -> vector<128x128xf32>
    %c0_39 = arith.constant 0 : index
    %c0_40 = arith.constant 0 : index
    %52 = vector.load %arg15[%c0_39, %c0_40] : memref<1x128xf32, #tpu.memory_space<vmem>>, vector<1x128xf32>
    %53 = vector.broadcast %52 : vector<1x128xf32> to vector<128x128xf32>
    %54 = arith.addf %51, %53 : vector<128x128xf32>
    %c0_41 = arith.constant 0 : index
    %c0_42 = arith.constant 0 : index
    %55 = vector.load %arg16[%c0_41, %c0_42] : memref<128x128xf32, #tpu.memory_space<vmem>>, vector<128x128xf32>
    tpu.vector_store %arg16[%c0_41, %c0_42], %54 {strides = array<i32>} : memref<128x128xf32, #tpu.memory_space<vmem>>, vector<128x128xf32>,
    return
  }
  func.func @transform_0(%arg0: i32) -> (i32, i32) {
    %c0_i32 = arith.constant 0 : i32
    %c0_i32_0 = arith.constant 0 : i32
    return %arg0, %c0_i32 : i32, i32
  }
  func.func @transform_1(%arg0: i32) -> (i32, i32) {
    %c0_i32 = arith.constant 0 : i32
    %c0_i32_0 = arith.constant 0 : i32
    %c0_i32_1 = arith.constant 0 : i32
    return %c0_i32, %c0_i32_0 : i32, i32
  }
  func.func @transform_2(%arg0: i32) -> (i32, i32) {
    %c0_i32 = arith.constant 0 : i32
    %c0_i32_0 = arith.constant 0 : i32
    %c0_i32_1 = arith.constant 0 : i32
    return %c0_i32, %c0_i32_0 : i32, i32
  }
  func.func @transform_3(%arg0: i32) -> (i32, i32) {
    %c0_i32 = arith.constant 0 : i32
    %c0_i32_0 = arith.constant 0 : i32
    %c0_i32_1 = arith.constant 0 : i32
    return %c0_i32, %c0_i32_0 : i32, i32
  }
  func.func @transform_4(%arg0: i32) -> (i32, i32) {
    %c0_i32 = arith.constant 0 : i32
    %c0_i32_0 = arith.constant 0 : i32
    %c0_i32_1 = arith.constant 0 : i32
    return %c0_i32, %c0_i32_0 : i32, i32
  }
  func.func @transform_5(%arg0: i32) -> (i32, i32) {
    %c0_i32 = arith.constant 0 : i32
    %c0_i32_0 = arith.constant 0 : i32
    %c0_i32_1 = arith.constant 0 : i32
    return %c0_i32, %c0_i32_0 : i32, i32
  }
  func.func @transform_6(%arg0: i32) -> (i32, i32) {
    %c0_i32 = arith.constant 0 : i32
    %c0_i32_0 = arith.constant 0 : i32
    %c0_i32_1 = arith.constant 0 : i32
    return %c0_i32, %c0_i32_0 : i32, i32
  }
  func.func @transform_7(%arg0: i32) -> (i32, i32) {
    %c0_i32 = arith.constant 0 : i32
    %c0_i32_0 = arith.constant 0 : i32
    %c0_i32_1 = arith.constant 0 : i32
    return %c0_i32, %c0_i32_0 : i32, i32
  }
  func.func @transform_8(%arg0: i32) -> (i32, i32) {
    %c0_i32 = arith.constant 0 : i32
    %c0_i32_0 = arith.constant 0 : i32
    %c0_i32_1 = arith.constant 0 : i32
    return %c0_i32, %c0_i32_0 : i32, i32
  }
  func.func @transform_9(%arg0: i32) -> (i32, i32) {
    %c0_i32 = arith.constant 0 : i32
    %c0_i32_0 = arith.constant 0 : i32
    %c0_i32_1 = arith.constant 0 : i32
    return %c0_i32, %c0_i32_0 : i32, i32
  }
  func.func @transform_10(%arg0: i32) -> (i32, i32) {
    %c0_i32 = arith.constant 0 : i32
    %c0_i32_0 = arith.constant 0 : i32
    %c0_i32_1 = arith.constant 0 : i32
    return %c0_i32, %c0_i32_0 : i32, i32
  }
  func.func @transform_11(%arg0: i32) -> (i32, i32) {
    %c0_i32 = arith.constant 0 : i32
    %c0_i32_0 = arith.constant 0 : i32
    %c0_i32_1 = arith.constant 0 : i32
    return %c0_i32, %c0_i32_0 : i32, i32
  }
  func.func @transform_12(%arg0: i32) -> (i32, i32) {
    %c0_i32 = arith.constant 0 : i32
    %c0_i32_0 = arith.constant 0 : i32
    %c0_i32_1 = arith.constant 0 : i32
    return %c0_i32, %c0_i32_0 : i32, i32
  }
  func.func @transform_13(%arg0: i32) -> (i32, i32) {
    %c0_i32 = arith.constant 0 : i32
    %c0_i32_0 = arith.constant 0 : i32
    %c0_i32_1 = arith.constant 0 : i32
    return %c0_i32, %c0_i32_0 : i32, i32
  }
  func.func @transform_14(%arg0: i32) -> (i32, i32) {
    %c0_i32 = arith.constant 0 : i32
    %c0_i32_0 = arith.constant 0 : i32
    %c0_i32_1 = arith.constant 0 : i32
    return %c0_i32, %c0_i32_0 : i32, i32
  }
  func.func @transform_15(%arg0: i32) -> (i32, i32) {
    %c0_i32 = arith.constant 0 : i32
    %c0_i32_0 = arith.constant 0 : i32
    return %arg0, %c0_i32 : i32, i32
  }
}

</mosaic_0001>

<llo_original>
// kernel: tpu_custom_call.1
$region0: #{tpu_custom_call.1}
  #allocation0 [shape = 'u32[]', space=smem, size = 0x4, offset = 0x4, fixed_abs, tag = 'smem constant byte address 0x4 - core index']
  #allocation1 [shape = 'u32[144,128]{1,0:T(1,128)}', space=vmem, size = 0x12000, scoped, tag = 'internal scratch']
  %s0 = inlined_call_operand.hbm [shape: f32[256,128], index: 0, kind: input, shape index: {}]
  %s1 = inlined_call_operand.hbm [shape: bf16[128,128], index: 1, kind: input, shape index: {}]
  %s2 = inlined_call_operand.vmem [shape: f32[1,128], index: 2, kind: input, shape index: {}]
  %s3 = inlined_call_operand.hbm [shape: bf16[128,128], index: 3, kind: input, shape index: {}]
  %s4 = inlined_call_operand.vmem [shape: f32[1,128], index: 4, kind: input, shape index: {}]
  %s5 = inlined_call_operand.hbm [shape: bf16[128,128], index: 5, kind: input, shape index: {}]
  %s6 = inlined_call_operand.vmem [shape: f32[1,128], index: 6, kind: input, shape index: {}]
  %s7 = inlined_call_operand.hbm [shape: bf16[128,128], index: 7, kind: input, shape index: {}]
  %s8 = inlined_call_operand.vmem [shape: f32[1,128], index: 8, kind: input, shape index: {}]
  %s9 = inlined_call_operand.hbm [shape: bf16[128,128], index: 9, kind: input, shape index: {}]
  %s10 = inlined_call_operand.vmem [shape: f32[1,128], index: 10, kind: input, shape index: {}]
  %s11 = inlined_call_operand.hbm [shape: bf16[128,128], index: 11, kind: input, shape index: {}]
  %s12 = inlined_call_operand.vmem [shape: f32[1,128], index: 12, kind: input, shape index: {}]
  %s13 = inlined_call_operand.hbm [shape: bf16[128,128], index: 13, kind: input, shape index: {}]
  %s14 = inlined_call_operand.vmem [shape: f32[1,128], index: 14, kind: input, shape index: {}]
  %s15 = inlined_call_operand.hbm [shape: f32[256,128], index: 15, kind: output, shape index: {}]
  %s16 = sld [smem:[#allocation0]]
  $region125: #{tpu_custom_call.1} parent=0
    _
  %s18 = ssub.s32 1, %s16
  %s19 = scalar_select 0, %s18, %s16
  $region1: #{tpu_custom_call.1} parent=0
    #allocation2 [shape = 'u8[131072]{0}', space=vmem, size = 0x20000, scoped, tag = 'input window, operand 0']
    #allocation3 [shape = 's32[2]{0}', space=sflag, size = 0x8, scoped, tag = 'scoped memory for tpu_custom_call.1']
    #allocation4 [shape = 's32[2]{0}', space=sflag, size = 0x8, scoped, tag = 'scoped memory for tpu_custom_call.1']
    #allocation5 [shape = 'u8[32768]{0}', space=vmem, size = 0x8000, scoped, tag = 'input window, operand 1, single buffered']
    #allocation6 [shape = 's32[1]{0}', space=sflag, size = 0x4, scoped, tag = 'scoped memory for tpu_custom_call.1']
    #allocation7 [shape = 'u8[32768]{0}', space=vmem, size = 0x8000, scoped, tag = 'input window, operand 3, single buffered']
    #allocation8 [shape = 'u8[32768]{0}', space=vmem, size = 0x8000, scoped, tag = 'input window, operand 5, single buffered']
    #allocation9 [shape = 's32[1]{0}', space=sflag, size = 0x4, scoped, tag = 'scoped memory for tpu_custom_call.1']
    #allocation10 [shape = 'u8[32768]{0}', space=vmem, size = 0x8000, scoped, tag = 'input window, operand 7, single buffered']
    #allocation11 [shape = 'u8[32768]{0}', space=vmem, size = 0x8000, scoped, tag = 'input window, operand 9, single buffered']
    #allocation12 [shape = 's32[1]{0}', space=sflag, size = 0x4, scoped, tag = 'scoped memory for tpu_custom_call.1']
    #allocation13 [shape = 'u8[32768]{0}', space=vmem, size = 0x8000, scoped, tag = 'input window, operand 11, single buffered']
    #allocation14 [shape = 'u8[32768]{0}', space=vmem, size = 0x8000, scoped, tag = 'input window, operand 13, single buffered']
    #allocation15 [shape = 's32[1]{0}', space=sflag, size = 0x4, scoped, tag = 'scoped memory for tpu_custom_call.1']
    #allocation16 [shape = 'u8[131072]{0}', space=vmem, size = 0x20000, scoped, tag = 'output window, operand 0']
    %20 = vsyncpa [#allocation3], 0
    %s21 = scalar_lea.sflag [#allocation3], 1
    %22 = vsyncpa %s21, 0
    %23 = vsyncpa [#allocation6], 0
    %24 = vsyncpa [#allocation9], 0
    %25 = vsyncpa [#allocation12], 0
    %26 = vsyncpa [#allocation15], 0
    %27 = vsyncpa [#allocation4], 0
    %s28 = scalar_lea.sflag [#allocation4], 1
    %29 = vsyncpa %s28, 0
    loop: start=0, step=1, limit=4
    $region2: #{tpu_custom_call.1} parent=1 // loop_pre_header
      _
    $region3: #{tpu_custom_call.1} parent=1 // loop_header
      %s31 = sphi 0, %s35
      %p32 = scmp.ge.s32.totalorder %s31, 4
      %s41 = sphi 0, %s43
      %s44 = sphi 0, %s41
      %s45 = sphi 0, %s44
      %s61 = sphi 0, %s45
      %s65 = sphi 0, %s65
      %s67 = sphi 0, %s65
      %s68 = sphi 0, %s67
      %s82 = sphi 0, %s68
      %s86 = sphi 0, %s86
      %s88 = sphi 0, %s86
      %s89 = sphi 0, %s88
      %s103 = sphi 0, %s89
      %s107 = sphi 0, %s107
      %s109 = sphi 0, %s107
      %s110 = sphi 0, %s109
      %s124 = sphi 0, %s110
      %s128 = sphi 0, %s128
      %s130 = sphi 0, %s128
      %s131 = sphi 0, %s130
      %s145 = sphi 0, %s131
      %s149 = sphi 0, %s149
      %s151 = sphi 0, %s149
      %s152 = sphi 0, %s151
      %s166 = sphi 0, %s152
      %s170 = sphi 0, %s170
      %s172 = sphi 0, %s170
      %s173 = sphi 0, %s172
      %s187 = sphi 0, %s173
      %s191 = sphi 0, %s191
      %s193 = sphi 0, %s191
      %s194 = sphi 0, %s193
      %s208 = sphi 0, %s194
      %s212 = sphi 0, %s212
      %s214 = sphi 0, %s212
      %s215 = sphi 0, %s214
      %s229 = sphi 0, %s215
      %s233 = sphi 0, %s233
      %s235 = sphi 0, %s233
      %s236 = sphi 0, %s235
      %s250 = sphi 0, %s236
      %s254 = sphi 0, %s254
      %s256 = sphi 0, %s254
      %s257 = sphi 0, %s256
      %s271 = sphi 0, %s257
      %s275 = sphi 0, %s275
      %s277 = sphi 0, %s275
      %s278 = sphi 0, %s277
      %s292 = sphi 0, %s278
      %s296 = sphi 0, %s296
      %s298 = sphi 0, %s296
      %s299 = sphi 0, %s298
      %s313 = sphi 0, %s299
      %s317 = sphi 0, %s317
      %s319 = sphi 0, %s317
      %s320 = sphi 0, %s319
      %s334 = sphi 0, %s320
      %s338 = sphi 0, %s338
      %s340 = sphi 0, %s338
      %s341 = sphi 0, %s340
      %s355 = sphi 0, %s341
      %s361 = sphi 0, %s363
      %s364 = sphi 0, %s361
      %s365 = sphi 0, %s364
      %s381 = sphi 0, %s365
    $region4: #{tpu_custom_call.1} parent=1 // loop_header_branch
      %34 = sbr.rel (%p32) target = $region8
    $region5: #{tpu_custom_call.1} parent=1 // loop_body
      %s36 = ssub.s32 %s31, 1
      %s37 = ssub.s32 %s31, 2
      %s38 = sadd.s32 %s31, 1
      %s39 = ssub.s32 %s31, %s38
      %p40 = scmp.eq.s32.totalorder %s39, 0
      %s42 = sadd.s32 %s41, 1
      %s43 = scalar_select %p40, %s41, %s42
      %p46 = pneg %p40
      %p47 = scmp.eq.s32.totalorder %s31, 1
      %p48 = por %p46, %p47
      %p49 = scmp.ne.s32.totalorder %s41, %s44
      %p50 = scmp.eq.s32.totalorder %s31, 0
      %p51 = por %p49, %p50
      %p52 = scmp.ne.s32.totalorder %s41, %s44
      %p53 = scmp.eq.s32.totalorder %s36, 1
      %p54 = por %p52, %p53
      %p55 = scmp.ne.s32.totalorder %s44, %s45
      %p56 = scmp.eq.s32.totalorder %s36, 0
      %p57 = por %p55, %p56
      %p58 = scmp.ne.s32.totalorder %s44, %s45
      %p59 = scmp.eq.s32.totalorder %s37, 1
      %p60 = por %p58, %p59
      %p62 = scmp.ne.s32.totalorder %s45, %s61
      %p63 = scmp.eq.s32.totalorder %s37, 0
      %p64 = por %p62, %p63
      %s66 = sadd.s32 %s65, 1
      %p69 = scmp.eq.s32.totalorder %s31, 1
      %p70 = scmp.ne.s32.totalorder %s65, %s67
      %p71 = scmp.eq.s32.totalorder %s31, 0
      %p72 = por %p70, %p71
      %p73 = scmp.ne.s32.totalorder %s65, %s67
      %p74 = scmp.eq.s32.totalorder %s36, 1
      %p75 = por %p73, %p74
      %p76 = scmp.ne.s32.totalorder %s67, %s68
      %p77 = scmp.eq.s32.totalorder %s36, 0
      %p78 = por %p76, %p77
      %p79 = scmp.ne.s32.totalorder %s67, %s68
      %p80 = scmp.eq.s32.totalorder %s37, 1
      %p81 = por %p79, %p80
      %p83 = scmp.ne.s32.totalorder %s68, %s82
      %p84 = scmp.eq.s32.totalorder %s37, 0
      %p85 = por %p83, %p84
      %s87 = sadd.s32 %s86, 1
      %p90 = scmp.eq.s32.totalorder %s31, 1
      %p91 = scmp.ne.s32.totalorder %s86, %s88
      %p92 = scmp.eq.s32.totalorder %s31, 0
      %p93 = por %p91, %p92
      %p94 = scmp.ne.s32.totalorder %s86, %s88
      %p95 = scmp.eq.s32.totalorder %s36, 1
      %p96 = por %p94, %p95
      %p97 = scmp.ne.s32.totalorder %s88, %s89
      %p98 = scmp.eq.s32.totalorder %s36, 0
      %p99 = por %p97, %p98
      %p100 = scmp.ne.s32.totalorder %s88, %s89
      %p101 = scmp.eq.s32.totalorder %s37, 1
      %p102 = por %p100, %p101
      %p104 = scmp.ne.s32.totalorder %s89, %s103
      %p105 = scmp.eq.s32.totalorder %s37, 0
      %p106 = por %p104, %p105
      %s108 = sadd.s32 %s107, 1
      %p111 = scmp.eq.s32.totalorder %s31, 1
      %p112 = scmp.ne.s32.totalorder %s107, %s109
      %p113 = scmp.eq.s32.totalorder %s31, 0
      %p114 = por %p112, %p113
      %p115 = scmp.ne.s32.totalorder %s107, %s109
      %p116 = scmp.eq.s32.totalorder %s36, 1
      %p117 = por %p115, %p116
      %p118 = scmp.ne.s32.totalorder %s109, %s110
      %p119 = scmp.eq.s32.totalorder %s36, 0
      %p120 = por %p118, %p119
      %p121 = scmp.ne.s32.totalorder %s109, %s110
      %p122 = scmp.eq.s32.totalorder %s37, 1
      %p123 = por %p121, %p122
      %p125 = scmp.ne.s32.totalorder %s110, %s124
      %p126 = scmp.eq.s32.totalorder %s37, 0
      %p127 = por %p125, %p126
      %s129 = sadd.s32 %s128, 1
      %p132 = scmp.eq.s32.totalorder %s31, 1
      %p133 = scmp.ne.s32.totalorder %s128, %s130
      %p134 = scmp.eq.s32.totalorder %s31, 0
      %p135 = por %p133, %p134
      %p136 = scmp.ne.s32.totalorder %s128, %s130
      %p137 = scmp.eq.s32.totalorder %s36, 1
      %p138 = por %p136, %p137
      %p139 = scmp.ne.s32.totalorder %s130, %s131
      %p140 = scmp.eq.s32.totalorder %s36, 0
      %p141 = por %p139, %p140
      %p142 = scmp.ne.s32.totalorder %s130, %s131
      %p143 = scmp.eq.s32.totalorder %s37, 1
      %p144 = por %p142, %p143
      %p146 = scmp.ne.s32.totalorder %s131, %s145
      %p147 = scmp.eq.s32.totalorder %s37, 0
      %p148 = por %p146, %p147
      %s150 = sadd.s32 %s149, 1
      %p153 = scmp.eq.s32.totalorder %s31, 1
      %p154 = scmp.ne.s32.totalorder %s149, %s151
      %p155 = scmp.eq.s32.totalorder %s31, 0
      %p156 = por %p154, %p155
      %p157 = scmp.ne.s32.totalorder %s149, %s151
      %p158 = scmp.eq.s32.totalorder %s36, 1
      %p159 = por %p157, %p158
      %p160 = scmp.ne.s32.totalorder %s151, %s152
      %p161 = scmp.eq.s32.totalorder %s36, 0
      %p162 = por %p160, %p161
      %p163 = scmp.ne.s32.totalorder %s151, %s152
      %p164 = scmp.eq.s32.totalorder %s37, 1
      %p165 = por %p163, %p164
      %p167 = scmp.ne.s32.totalorder %s152, %s166
      %p168 = scmp.eq.s32.totalorder %s37, 0
      %p169 = por %p167, %p168
      %s171 = sadd.s32 %s170, 1
      %p174 = scmp.eq.s32.totalorder %s31, 1
      %p175 = scmp.ne.s32.totalorder %s170, %s172
      %p176 = scmp.eq.s32.totalorder %s31, 0
      %p177 = por %p175, %p176
      %p178 = scmp.ne.s32.totalorder %s170, %s172
      %p179 = scmp.eq.s32.totalorder %s36, 1
      %p180 = por %p178, %p179
      %p181 = scmp.ne.s32.totalorder %s172, %s173
      %p182 = scmp.eq.s32.totalorder %s36, 0
      %p183 = por %p181, %p182
      %p184 = scmp.ne.s32.totalorder %s172, %s173
      %p185 = scmp.eq.s32.totalorder %s37, 1
      %p186 = por %p184, %p185
      %p188 = scmp.ne.s32.totalorder %s173, %s187
      %p189 = scmp.eq.s32.totalorder %s37, 0
      %p190 = por %p188, %p189
      %s192 = sadd.s32 %s191, 1
      %p195 = scmp.eq.s32.totalorder %s31, 1
      %p196 = scmp.ne.s32.totalorder %s191, %s193
      %p197 = scmp.eq.s32.totalorder %s31, 0
      %p198 = por %p196, %p197
      %p199 = scmp.ne.s32.totalorder %s191, %s193
      %p200 = scmp.eq.s32.totalorder %s36, 1
      %p201 = por %p199, %p200
      %p202 = scmp.ne.s32.totalorder %s193, %s194
      %p203 = scmp.eq.s32.totalorder %s36, 0
      %p204 = por %p202, %p203
      %p205 = scmp.ne.s32.totalorder %s193, %s194
      %p206 = scmp.eq.s32.totalorder %s37, 1
      %p207 = por %p205, %p206
      %p209 = scmp.ne.s32.totalorder %s194, %s208
      %p210 = scmp.eq.s32.totalorder %s37, 0
      %p211 = por %p209, %p210
      %s213 = sadd.s32 %s212, 1
      %p216 = scmp.eq.s32.totalorder %s31, 1
      %p217 = scmp.ne.s32.totalorder %s212, %s214
      %p218 = scmp.eq.s32.totalorder %s31, 0
      %p219 = por %p217, %p218
      %p220 = scmp.ne.s32.totalorder %s212, %s214
      %p221 = scmp.eq.s32.totalorder %s36, 1
      %p222 = por %p220, %p221
      %p223 = scmp.ne.s32.totalorder %s214, %s215
      %p224 = scmp.eq.s32.totalorder %s36, 0
      %p225 = por %p223, %p224
      %p226 = scmp.ne.s32.totalorder %s214, %s215
      %p227 = scmp.eq.s32.totalorder %s37, 1
      %p228 = por %p226, %p227
      %p230 = scmp.ne.s32.totalorder %s215, %s229
      %p231 = scmp.eq.s32.totalorder %s37, 0
      %p232 = por %p230, %p231
      %s234 = sadd.s32 %s233, 1
      %p237 = scmp.eq.s32.totalorder %s31, 1
      %p238 = scmp.ne.s32.totalorder %s233, %s235
      %p239 = scmp.eq.s32.totalorder %s31, 0
      %p240 = por %p238, %p239
      %p241 = scmp.ne.s32.totalorder %s233, %s235
      %p242 = scmp.eq.s32.totalorder %s36, 1
      %p243 = por %p241, %p242
      %p244 = scmp.ne.s32.totalorder %s235, %s236
      %p245 = scmp.eq.s32.totalorder %s36, 0
      %p246 = por %p244, %p245
      %p247 = scmp.ne.s32.totalorder %s235, %s236
      %p248 = scmp.eq.s32.totalorder %s37, 1
      %p249 = por %p247, %p248
      %p251 = scmp.ne.s32.totalorder %s236, %s250
      %p252 = scmp.eq.s32.totalorder %s37, 0
      %p253 = por %p251, %p252
      %s255 = sadd.s32 %s254, 1
      %p258 = scmp.eq.s32.totalorder %s31, 1
      %p259 = scmp.ne.s32.totalorder %s254, %s256
      %p260 = scmp.eq.s32.totalorder %s31, 0
      %p261 = por %p259, %p260
      %p262 = scmp.ne.s32.totalorder %s254, %s256
      %p263 = scmp.eq.s32.totalorder %s36, 1
      %p264 = por %p262, %p263
      %p265 = scmp.ne.s32.totalorder %s256, %s257
      %p266 = scmp.eq.s32.totalorder %s36, 0
      %p267 = por %p265, %p266
      %p268 = scmp.ne.s32.totalorder %s256, %s257
      %p269 = scmp.eq.s32.totalorder %s37, 1
      %p270 = por %p268, %p269
      %p272 = scmp.ne.s32.totalorder %s257, %s271
      %p273 = scmp.eq.s32.totalorder %s37, 0
      %p274 = por %p272, %p273
      %s276 = sadd.s32 %s275, 1
      %p279 = scmp.eq.s32.totalorder %s31, 1
      %p280 = scmp.ne.s32.totalorder %s275, %s277
      %p281 = scmp.eq.s32.totalorder %s31, 0
      %p282 = por %p280, %p281
      %p283 = scmp.ne.s32.totalorder %s275, %s277
      %p284 = scmp.eq.s32.totalorder %s36, 1
      %p285 = por %p283, %p284
      %p286 = scmp.ne.s32.totalorder %s277, %s278
      %p287 = scmp.eq.s32.totalorder %s36, 0
      %p288 = por %p286, %p287
      %p289 = scmp.ne.s32.totalorder %s277, %s278
      %p290 = scmp.eq.s32.totalorder %s37, 1
      %p291 = por %p289, %p290
      %p293 = scmp.ne.s32.totalorder %s278, %s292
      %p294 = scmp.eq.s32.totalorder %s37, 0
      %p295 = por %p293, %p294
      %s297 = sadd.s32 %s296, 1
      %p300 = scmp.eq.s32.totalorder %s31, 1
      %p301 = scmp.ne.s32.totalorder %s296, %s298
      %p302 = scmp.eq.s32.totalorder %s31, 0
      %p303 = por %p301, %p302
      %p304 = scmp.ne.s32.totalorder %s296, %s298
      %p305 = scmp.eq.s32.totalorder %s36, 1
      %p306 = por %p304, %p305
      %p307 = scmp.ne.s32.totalorder %s298, %s299
      %p308 = scmp.eq.s32.totalorder %s36, 0
      %p309 = por %p307, %p308
      %p310 = scmp.ne.s32.totalorder %s298, %s299
      %p311 = scmp.eq.s32.totalorder %s37, 1
      %p312 = por %p310, %p311
      %p314 = scmp.ne.s32.totalorder %s299, %s313
      %p315 = scmp.eq.s32.totalorder %s37, 0
      %p316 = por %p314, %p315
      %s318 = sadd.s32 %s317, 1
      %p321 = scmp.eq.s32.totalorder %s31, 1
      %p322 = scmp.ne.s32.totalorder %s317, %s319
      %p323 = scmp.eq.s32.totalorder %s31, 0
      %p324 = por %p322, %p323
      %p325 = scmp.ne.s32.totalorder %s317, %s319
      %p326 = scmp.eq.s32.totalorder %s36, 1
      %p327 = por %p325, %p326
      %p328 = scmp.ne.s32.totalorder %s319, %s320
      %p329 = scmp.eq.s32.totalorder %s36, 0
      %p330 = por %p328, %p329
      %p331 = scmp.ne.s32.totalorder %s319, %s320
      %p332 = scmp.eq.s32.totalorder %s37, 1
      %p333 = por %p331, %p332
      %p335 = scmp.ne.s32.totalorder %s320, %s334
      %p336 = scmp.eq.s32.totalorder %s37, 0
      %p337 = por %p335, %p336
      %s339 = sadd.s32 %s338, 1
      %p342 = scmp.eq.s32.totalorder %s31, 1
      %p343 = scmp.ne.s32.totalorder %s338, %s340
      %p344 = scmp.eq.s32.totalorder %s31, 0
      %p345 = por %p343, %p344
      %p346 = scmp.ne.s32.totalorder %s338, %s340
      %p347 = scmp.eq.s32.totalorder %s36, 1
      %p348 = por %p346, %p347
      %p349 = scmp.ne.s32.totalorder %s340, %s341
      %p350 = scmp.eq.s32.totalorder %s36, 0
      %p351 = por %p349, %p350
      %p352 = scmp.ne.s32.totalorder %s340, %s341
      %p353 = scmp.eq.s32.totalorder %s37, 1
      %p354 = por %p352, %p353
      %p356 = scmp.ne.s32.totalorder %s341, %s355
      %p357 = scmp.eq.s32.totalorder %s37, 0
      %p358 = por %p356, %p357
      %s359 = ssub.s32 %s31, %s38
      %p360 = scmp.eq.s32.totalorder %s359, 0
      %s362 = sadd.s32 %s361, 1
      %s363 = scalar_select %p360, %s361, %s362
      %p366 = pneg %p360
      %p367 = scmp.eq.s32.totalorder %s31, 1
      %p368 = por %p366, %p367
      %p369 = scmp.ne.s32.totalorder %s361, %s364
      %p370 = scmp.eq.s32.totalorder %s31, 0
      %p371 = por %p369, %p370
      %p372 = scmp.ne.s32.totalorder %s361, %s364
      %p373 = scmp.eq.s32.totalorder %s36, 1
      %p374 = por %p372, %p373
      %p375 = scmp.ne.s32.totalorder %s364, %s365
      %p376 = scmp.eq.s32.totalorder %s36, 0
      %p377 = por %p375, %p376
      %p378 = scmp.ne.s32.totalorder %s364, %s365
      %p379 = scmp.eq.s32.totalorder %s37, 1
      %p380 = por %p378, %p379
      %p382 = scmp.ne.s32.totalorder %s365, %s381
      %p383 = scmp.eq.s32.totalorder %s37, 0
      %p384 = por %p382, %p383
      %p385 = scmp.le.s32.totalorder 1, %s31
      %p386 = scmp.lt.s32.totalorder %s31, 3
      %p387 = pnand %p385, %p386
      %p388 = pneg %p387
      // Predicated region
      $region9: #{tpu_custom_call.1} parent=5 // pred_check
        _
      $region10: #{tpu_custom_call.1} parent=5 // pred_check_branch
        %390 = sbr.rel (%p387) target = $region12
      $region11: #{tpu_custom_call.1} parent=5 // pred_region
        %s391 = ssub.s32 %s31, 1
        // Predicated region
        $region13: #{tpu_custom_call.1} parent=11 // pred_check
          %p392 = pneg %p78
        $region14: #{tpu_custom_call.1} parent=11 // pred_check_branch
          %394 = sbr.rel (%p392) target = $region16
        $region15: #{tpu_custom_call.1} parent=11 // pred_region
          %s396 = ssub.s32 1024, 1024
          %397 = vsyncadd [#allocation6], %s396
          %s398 = sshll.u32 [#allocation5], 4
          %s399 = int_to_ptr.vmem [resolvable:$true] %s398
          %404 = dma.hbm_to_vmem [thread:$0]  %s1, 1024, %s399, [#allocation6], 64, 64, 4
        $region16: #{tpu_custom_call.1} parent=11 // pred_fallthru
          _
        // Predicated region
        $region17: #{tpu_custom_call.1} parent=11 // pred_check
          %p405 = pneg %p99
        $region18: #{tpu_custom_call.1} parent=11 // pred_check_branch
          %407 = sbr.rel (%p405) target = $region20
        $region19: #{tpu_custom_call.1} parent=11 // pred_region
          _
        $region20: #{tpu_custom_call.1} parent=11 // pred_fallthru
          _
        // Predicated region
        $region21: #{tpu_custom_call.1} parent=11 // pred_check
          %p408 = pneg %p120
        $region22: #{tpu_custom_call.1} parent=11 // pred_check_branch
          %410 = sbr.rel (%p408) target = $region24
        $region23: #{tpu_custom_call.1} parent=11 // pred_region
          %s412 = ssub.s32 1024, 1024
          %413 = vsyncadd [#allocation6], %s412
          %s414 = sshll.u32 [#allocation7], 4
          %s415 = int_to_ptr.vmem [resolvable:$true] %s414
          %420 = dma.hbm_to_vmem [thread:$0]  %s3, 1024, %s415, [#allocation6], 64, 64, 4
        $region24: #{tpu_custom_call.1} parent=11 // pred_fallthru
          _
        // Predicated region
        $region25: #{tpu_custom_call.1} parent=11 // pred_check
          %p421 = pneg %p141
        $region26: #{tpu_custom_call.1} parent=11 // pred_check_branch
          %423 = sbr.rel (%p421) target = $region28
        $region27: #{tpu_custom_call.1} parent=11 // pred_region
          _
        $region28: #{tpu_custom_call.1} parent=11 // pred_fallthru
          _
        // Predicated region
        $region29: #{tpu_custom_call.1} parent=11 // pred_check
          %p424 = pneg %p162
        $region30: #{tpu_custom_call.1} parent=11 // pred_check_branch
          %426 = sbr.rel (%p424) target = $region32
        $region31: #{tpu_custom_call.1} parent=11 // pred_region
          %s428 = ssub.s32 1024, 1024
          %429 = vsyncadd [#allocation9], %s428
          %s430 = sshll.u32 [#allocation8], 4
          %s431 = int_to_ptr.vmem [resolvable:$true] %s430
          %436 = dma.hbm_to_vmem [thread:$0]  %s5, 1024, %s431, [#allocation9], 64, 64, 4
        $region32: #{tpu_custom_call.1} parent=11 // pred_fallthru
          _
        // Predicated region
        $region33: #{tpu_custom_call.1} parent=11 // pred_check
          %p437 = pneg %p183
        $region34: #{tpu_custom_call.1} parent=11 // pred_check_branch
          %439 = sbr.rel (%p437) target = $region36
        $region35: #{tpu_custom_call.1} parent=11 // pred_region
          _
        $region36: #{tpu_custom_call.1} parent=11 // pred_fallthru
          _
        // Predicated region
        $region37: #{tpu_custom_call.1} parent=11 // pred_check
          %p440 = pneg %p204
        $region38: #{tpu_custom_call.1} parent=11 // pred_check_branch
          %442 = sbr.rel (%p440) target = $region40
        $region39: #{tpu_custom_call.1} parent=11 // pred_region
          %s444 = ssub.s32 1024, 1024
          %445 = vsyncadd [#allocation9], %s444
          %s446 = sshll.u32 [#allocation10], 4
          %s447 = int_to_ptr.vmem [resolvable:$true] %s446
          %452 = dma.hbm_to_vmem [thread:$0]  %s7, 1024, %s447, [#allocation9], 64, 64, 4
        $region40: #{tpu_custom_call.1} parent=11 // pred_fallthru
          _
        // Predicated region
        $region41: #{tpu_custom_call.1} parent=11 // pred_check
          %p453 = pneg %p225
        $region42: #{tpu_custom_call.1} parent=11 // pred_check_branch
          %455 = sbr.rel (%p453) target = $region44
        $region43: #{tpu_custom_call.1} parent=11 // pred_region
          _
        $region44: #{tpu_custom_call.1} parent=11 // pred_fallthru
          _
        // Predicated region
        $region45: #{tpu_custom_call.1} parent=11 // pred_check
          %p456 = pneg %p246
        $region46: #{tpu_custom_call.1} parent=11 // pred_check_branch
          %458 = sbr.rel (%p456) target = $region48
        $region47: #{tpu_custom_call.1} parent=11 // pred_region
          %s460 = ssub.s32 1024, 1024
          %461 = vsyncadd [#allocation12], %s460
          %s462 = sshll.u32 [#allocation11], 4
          %s463 = int_to_ptr.vmem [resolvable:$true] %s462
          %468 = dma.hbm_to_vmem [thread:$0]  %s9, 1024, %s463, [#allocation12], 64, 64, 4
        $region48: #{tpu_custom_call.1} parent=11 // pred_fallthru
          _
        // Predicated region
        $region49: #{tpu_custom_call.1} parent=11 // pred_check
          %p469 = pneg %p267
        $region50: #{tpu_custom_call.1} parent=11 // pred_check_branch
          %471 = sbr.rel (%p469) target = $region52
        $region51: #{tpu_custom_call.1} parent=11 // pred_region
          _
        $region52: #{tpu_custom_call.1} parent=11 // pred_fallthru
          _
        // Predicated region
        $region53: #{tpu_custom_call.1} parent=11 // pred_check
          %p472 = pneg %p288
        $region54: #{tpu_custom_call.1} parent=11 // pred_check_branch
          %474 = sbr.rel (%p472) target = $region56
        $region55: #{tpu_custom_call.1} parent=11 // pred_region
          %s476 = ssub.s32 1024, 1024
          %477 = vsyncadd [#allocation12], %s476
          %s478 = sshll.u32 [#allocation13], 4
          %s479 = int_to_ptr.vmem [resolvable:$true] %s478
          %484 = dma.hbm_to_vmem [thread:$0]  %s11, 1024, %s479, [#allocation12], 64, 64, 4
        $region56: #{tpu_custom_call.1} parent=11 // pred_fallthru
          _
        // Predicated region
        $region57: #{tpu_custom_call.1} parent=11 // pred_check
          %p485 = pneg %p309
        $region58: #{tpu_custom_call.1} parent=11 // pred_check_branch
          %487 = sbr.rel (%p485) target = $region60
        $region59: #{tpu_custom_call.1} parent=11 // pred_region
          _
        $region60: #{tpu_custom_call.1} parent=11 // pred_fallthru
          _
        // Predicated region
        $region61: #{tpu_custom_call.1} parent=11 // pred_check
          %p488 = pneg %p330
        $region62: #{tpu_custom_call.1} parent=11 // pred_check_branch
          %490 = sbr.rel (%p488) target = $region64
        $region63: #{tpu_custom_call.1} parent=11 // pred_region
          %s492 = ssub.s32 1024, 1024
          %493 = vsyncadd [#allocation15], %s492
          %s494 = sshll.u32 [#allocation14], 4
          %s495 = int_to_ptr.vmem [resolvable:$true] %s494
          %500 = dma.hbm_to_vmem [thread:$0]  %s13, 1024, %s495, [#allocation15], 64, 64, 4
        $region64: #{tpu_custom_call.1} parent=11 // pred_fallthru
          _
        // Predicated region
        $region65: #{tpu_custom_call.1} parent=11 // pred_check
          %p501 = pneg %p351
        $region66: #{tpu_custom_call.1} parent=11 // pred_check_branch
          %503 = sbr.rel (%p501) target = $region68
        $region67: #{tpu_custom_call.1} parent=11 // pred_region
          _
        $region68: #{tpu_custom_call.1} parent=11 // pred_fallthru
          _
      $region12: #{tpu_custom_call.1} parent=5 // pred_fallthru
        _
      %p504 = scmp.lt.s32.totalorder %s31, 2
      // Predicated region
      $region69: #{tpu_custom_call.1} parent=5 // pred_check
        %p505 = pneg %p504
      $region70: #{tpu_custom_call.1} parent=5 // pred_check_branch
        %507 = sbr.rel (%p505) target = $region72
      $region71: #{tpu_custom_call.1} parent=5 // pred_region
        // Predicated region
        $region73: #{tpu_custom_call.1} parent=71 // pred_check
          %p508 = pneg %p51
        $region74: #{tpu_custom_call.1} parent=71 // pred_check_branch
          %510 = sbr.rel (%p508) target = $region76
        $region75: #{tpu_custom_call.1} parent=71 // pred_region
          %s511 = sand.u32 %s41, 1
          %s512 = scalar_lea.sflag [#allocation3], %s511
          %s513 = sand.u32 %s41, 1
          %s514 = smul.addr %s513, 128
          %s515 = scalar_lea.vmem [#allocation2], %s514
          %s516 = smul.u32 16, %s31
          %s518 = ssub.s32 2048, 2048
          %519 = vsyncadd %s512, %s518
          %s520 = smul.addr %s516, 128
          %s521 = scalar_lea.hbm %s0, %s520
          %s522 = sshll.u32 %s515, 4
          %s523 = int_to_ptr.vmem [resolvable:$true] %s522
          %528 = dma.hbm_to_vmem [thread:$0]  %s521, 2048, %s523, %s512, 128, 128, 8
        $region76: #{tpu_custom_call.1} parent=71 // pred_fallthru
          _
      $region72: #{tpu_custom_call.1} parent=5 // pred_fallthru
        _
      %p529 = scmp.le.s32.totalorder 1, %s31
      %p530 = scmp.lt.s32.totalorder %s31, 3
      %p531 = pnand %p529, %p530
      %p532 = pneg %p531
      // Predicated region
      $region77: #{tpu_custom_call.1} parent=5 // pred_check
        _
      $region78: #{tpu_custom_call.1} parent=5 // pred_check_branch
        %534 = sbr.rel (%p531) target = $region80
      $region79: #{tpu_custom_call.1} parent=5 // pred_region
        %s535 = ssub.s32 %s31, 1
        %s536 = sand.u32 %s44, 1
        %s537 = scalar_lea.sflag [#allocation3], %s536
        %s538 = sand.u32 %s44, 1
        %s539 = smul.addr %s538, 128
        %s540 = scalar_lea.vmem [#allocation2], %s539
        // Predicated region
        $region81: #{tpu_custom_call.1} parent=79 // pred_check
          %p541 = pneg %p57
        $region82: #{tpu_custom_call.1} parent=79 // pred_check_branch
          %543 = sbr.rel (%p541) target = $region84
        $region83: #{tpu_custom_call.1} parent=79 // pred_region
          %544 = dma.done %s537, 2048
        $region84: #{tpu_custom_call.1} parent=79 // pred_fallthru
          _
        // Predicated region
        $region85: #{tpu_custom_call.1} parent=79 // pred_check
          %p545 = pneg %p78
        $region86: #{tpu_custom_call.1} parent=79 // pred_check_branch
          %547 = sbr.rel (%p545) target = $region88
        $region87: #{tpu_custom_call.1} parent=79 // pred_region
          %548 = dma.done [#allocation6], 1024
        $region88: #{tpu_custom_call.1} parent=79 // pred_fallthru
          _
        // Predicated region
        $region89: #{tpu_custom_call.1} parent=79 // pred_check
          %p549 = pneg %p120
        $region90: #{tpu_custom_call.1} parent=79 // pred_check_branch
          %551 = sbr.rel (%p549) target = $region92
        $region91: #{tpu_custom_call.1} parent=79 // pred_region
          %552 = dma.done [#allocation6], 1024
        $region92: #{tpu_custom_call.1} parent=79 // pred_fallthru
          _
        // Predicated region
        $region93: #{tpu_custom_call.1} parent=79 // pred_check
          %p553 = pneg %p162
        $region94: #{tpu_custom_call.1} parent=79 // pred_check_branch
          %555 = sbr.rel (%p553) target = $region96
        $region95: #{tpu_custom_call.1} parent=79 // pred_region
          %556 = dma.done [#allocation9], 1024
        $region96: #{tpu_custom_call.1} parent=79 // pred_fallthru
          _
        // Predicated region
        $region97: #{tpu_custom_call.1} parent=79 // pred_check
          %p557 = pneg %p204
        $region98: #{tpu_custom_call.1} parent=79 // pred_check_branch
          %559 = sbr.rel (%p557) target = $region100
        $region99: #{tpu_custom_call.1} parent=79 // pred_region
          %560 = dma.done [#allocation9], 1024
        $region100: #{tpu_custom_call.1} parent=79 // pred_fallthru
          _
        // Predicated region
        $region101: #{tpu_custom_call.1} parent=79 // pred_check
          %p561 = pneg %p246
        $region102: #{tpu_custom_call.1} parent=79 // pred_check_branch
          %563 = sbr.rel (%p561) target = $region104
        $region103: #{tpu_custom_call.1} parent=79 // pred_region
          %564 = dma.done [#allocation12], 1024
        $region104: #{tpu_custom_call.1} parent=79 // pred_fallthru
          _
        // Predicated region
        $region105: #{tpu_custom_call.1} parent=79 // pred_check
          %p565 = pneg %p288
        $region106: #{tpu_custom_call.1} parent=79 // pred_check_branch
          %567 = sbr.rel (%p565) target = $region108
        $region107: #{tpu_custom_call.1} parent=79 // pred_region
          %568 = dma.done [#allocation12], 1024
        $region108: #{tpu_custom_call.1} parent=79 // pred_fallthru
          _
        // Predicated region
        $region109: #{tpu_custom_call.1} parent=79 // pred_check
          %p569 = pneg %p330
        $region110: #{tpu_custom_call.1} parent=79 // pred_check_branch
          %571 = sbr.rel (%p569) target = $region112
        $region111: #{tpu_custom_call.1} parent=79 // pred_region
          %572 = dma.done [#allocation15], 1024
        $region112: #{tpu_custom_call.1} parent=79 // pred_fallthru
          _
        %s573 = sand.u32 %s44, 1
        %s574 = scalar_lea.sflag [#allocation3], %s573
        %s575 = sand.u32 %s44, 1
        %s576 = smul.addr %s575, 128
        %s577 = scalar_lea.vmem [#allocation2], %s576
        %p578 = pneg %p57
        %p579 = pneg %p54
        %p580 = pneg %p78
        %p581 = pneg %p75
        %p582 = pneg %p99
        %p583 = pneg %p96
        %p584 = pneg %p120
        %p585 = pneg %p117
        %p586 = pneg %p141
        %p587 = pneg %p138
        %p588 = pneg %p162
        %p589 = pneg %p159
        %p590 = pneg %p183
        %p591 = pneg %p180
        %p592 = pneg %p204
        %p593 = pneg %p201
        %p594 = pneg %p225
        %p595 = pneg %p222
        %p596 = pneg %p246
        %p597 = pneg %p243
        %p598 = pneg %p267
        %p599 = pneg %p264
        %p600 = pneg %p288
        %p601 = pneg %p285
        %p602 = pneg %p309
        %p603 = pneg %p306
        %p604 = pneg %p330
        %p605 = pneg %p327
        %p606 = pneg %p351
        %p607 = pneg %p348
        %p608 = pneg %p377
        %p609 = pneg %p374
        %s610 = sand.u32 %s364, 1
        %s611 = scalar_lea.sflag [#allocation4], %s610
        %s612 = sand.u32 %s364, 1
        %s613 = smul.addr %s612, 128
        %s614 = scalar_lea.vmem [#allocation16], %s613
        %s615 = smul.u32 16, %s36
        %s616 = smul.u32 16, %s36
        %v618 = vld [vmem:[%s540] sm:$0xff]
        %v619 = vld [vmem:[%s540 + $0x8] sm:$0xff]
        %v620 = vld [vmem:[%s540 + $0x10] sm:$0xff]
        %v621 = vld [vmem:[%s540 + $0x18] sm:$0xff]
        %v622 = vld [vmem:[%s540 + $0x20] sm:$0xff]
        %v623 = vld [vmem:[%s540 + $0x28] sm:$0xff]
        %v624 = vld [vmem:[%s540 + $0x30] sm:$0xff]
        %v625 = vld [vmem:[%s540 + $0x38] sm:$0xff]
        %v626 = vld [vmem:[%s540 + $0x40] sm:$0xff]
        %v627 = vld [vmem:[%s540 + $0x48] sm:$0xff]
        %v628 = vld [vmem:[%s540 + $0x50] sm:$0xff]
        %v629 = vld [vmem:[%s540 + $0x58] sm:$0xff]
        %v630 = vld [vmem:[%s540 + $0x60] sm:$0xff]
        %v631 = vld [vmem:[%s540 + $0x68] sm:$0xff]
        %v632 = vld [vmem:[%s540 + $0x70] sm:$0xff]
        %v633 = vld [vmem:[%s540 + $0x78] sm:$0xff]
        %v634 = vpack.c.bf16 %v619, %v618
        %v635 = vpack.c.bf16 %v621, %v620
        %v636 = vpack.c.bf16 %v623, %v622
        %v637 = vpack.c.bf16 %v625, %v624
        %v638 = vpack.c.bf16 %v627, %v626
        %v639 = vpack.c.bf16 %v629, %v628
        %v640 = vpack.c.bf16 %v631, %v630
        %v641 = vpack.c.bf16 %v633, %v632
        %v642 = vld [vmem:[#allocation5] sm:$0xf]
        %v643 = vld [vmem:[#allocation5 + $0x4] sm:$0xf]
        %v644 = vld [vmem:[#allocation5 + $0x8] sm:$0xf]
        %v645 = vld [vmem:[#allocation5 + $0xc] sm:$0xf]
        %v646 = vld [vmem:[#allocation5 + $0x10] sm:$0xf]
        %v647 = vld [vmem:[#allocation5 + $0x14] sm:$0xf]
        %v648 = vld [vmem:[#allocation5 + $0x18] sm:$0xf]
        %v649 = vld [vmem:[#allocation5 + $0x1c] sm:$0xf]
        %v650 = vld [vmem:[#allocation5 + $0x20] sm:$0xf]
        %v651 = vld [vmem:[#allocation5 + $0x24] sm:$0xf]
        %v652 = vld [vmem:[#allocation5 + $0x28] sm:$0xf]
        %v653 = vld [vmem:[#allocation5 + $0x2c] sm:$0xf]
        %v654 = vld [vmem:[#allocation5 + $0x30] sm:$0xf]
        %v655 = vld [vmem:[#allocation5 + $0x34] sm:$0xf]
        %v656 = vld [vmem:[#allocation5 + $0x38] sm:$0xf]
        %v657 = vld [vmem:[#allocation5 + $0x3c] sm:$0xf]
        %v658 = vld [vmem:[%s2] sm:$0x1]
        %v660 = vlaneseq
        %v661 = vshrl.u32 %v660, 7
        %v662 = vsub.s32 0, %v661
        %v663 = vrot.slane %v658, %v662
        %v681 = vunpack.c.l.b16 %v642
        %v682 = vunpack.c.l.b16 %v643
        %v683 = vunpack.c.l.b16 %v644
        %v684 = vunpack.c.l.b16 %v645
        %v685 = vunpack.c.l.b16 %v646
        %v686 = vunpack.c.l.b16 %v647
        %v687 = vunpack.c.l.b16 %v648
        %v688 = vunpack.c.l.b16 %v649
        %v689 = vunpack.c.l.b16 %v650
        %v690 = vunpack.c.l.b16 %v651
        %v691 = vunpack.c.l.b16 %v652
        %v692 = vunpack.c.l.b16 %v653
        %v693 = vunpack.c.l.b16 %v654
        %v694 = vunpack.c.l.b16 %v655
        %v695 = vunpack.c.l.b16 %v656
        %v696 = vunpack.c.l.b16 %v657
        %v697 = vpack.c.b16 %v682, %v681
        %v698 = vpack.c.b16 %v684, %v683
        %v699 = vpack.c.b16 %v686, %v685
        %v700 = vpack.c.b16 %v688, %v687
        %v701 = vpack.c.b16 %v690, %v689
        %v702 = vpack.c.b16 %v692, %v691
        %v703 = vpack.c.b16 %v694, %v693
        %v704 = vpack.c.b16 %v696, %v695
        %713 = vmatprep.subr.bf16.mxu0 0
        %714 = vmatpush1.bf16.msra.mxu0 %v697
        %715 = vmatprep.subr.bf16.mxu0 0
        %716 = vmatpush1.bf16.msra.mxu0 %v698
        %717 = vmatprep.subr.bf16.mxu0 0
        %718 = vmatpush1.bf16.msra.mxu0 %v699
        %719 = vmatprep.subr.bf16.mxu0 0
        %720 = vmatpush1.bf16.msra.mxu0 %v700
        %721 = vmatprep.subr.bf16.mxu0 0
        %722 = vmatpush1.bf16.msra.mxu0 %v701
        %723 = vmatprep.subr.bf16.mxu0 0
        %724 = vmatpush1.bf16.msra.mxu0 %v702
        %725 = vmatprep.subr.bf16.mxu0 0
        %726 = vmatpush1.bf16.msra.mxu0 %v703
        %727 = vmatprep.subr.bf16.mxu0 0
        %728 = vmatpush1.bf16.msra.mxu0 %v704
        %729 = vmatprep.subr.bf16.mxu0 0
        %730 = vmatpush1.bf16.msra.mxu0 0
        %731 = vmatprep.subr.bf16.mxu0 0
        %732 = vmatpush1.bf16.msra.mxu0 0
        %733 = vmatprep.subr.bf16.mxu0 0
        %734 = vmatpush1.bf16.msra.mxu0 0
        %735 = vmatprep.subr.bf16.mxu0 0
        %736 = vmatpush1.bf16.msra.mxu0 0
        %737 = vmatprep.subr.bf16.mxu0 0
        %738 = vmatpush1.bf16.msra.mxu0 0
        %739 = vmatprep.subr.bf16.mxu0 0
        %740 = vmatpush1.bf16.msra.mxu0 0
        %741 = vmatprep.subr.bf16.mxu0 0
        %742 = vmatpush1.bf16.msra.mxu0 0
        %743 = vmatprep.subr.bf16.mxu0 0
        %744 = vmatpush1.bf16.msra.mxu0 0
        %745 = vmatprep.mubr.bf16.mxu0 0
        %746 = vmatmul.mubr.bf16.gmra.mrb[0].mxu0 %v634
        %v747 = vpop.f32.mrb[0].mxu0
        %v748 = vadd.f32 %v663, %v747
        %v749 = vpop.f32.mrb[0].mxu0
        %v750 = vpop.f32.mrb[0].mxu0
        %v751 = vadd.f32 %v663, %v750
        %v752 = vpop.f32.mrb[0].mxu0
        %753 = vmatprep.mubr.bf16.mxu0 0
        %754 = vmatmul.mubr.bf16.gmra.mrb[0].mxu0 %v635
        %v755 = vpop.f32.mrb[0].mxu0
        %v756 = vadd.f32 %v663, %v755
        %v757 = vpop.f32.mrb[0].mxu0
        %v758 = vpop.f32.mrb[0].mxu0
        %v759 = vadd.f32 %v663, %v758
        %v760 = vpop.f32.mrb[0].mxu0
        %761 = vmatprep.mubr.bf16.mxu0 0
        %762 = vmatmul.mubr.bf16.gmra.mrb[0].mxu0 %v636
        %v763 = vpop.f32.mrb[0].mxu0
        %v764 = vadd.f32 %v663, %v763
        %v765 = vpop.f32.mrb[0].mxu0
        %v766 = vpop.f32.mrb[0].mxu0
        %v767 = vadd.f32 %v663, %v766
        %v768 = vpop.f32.mrb[0].mxu0
        %769 = vmatprep.mubr.bf16.mxu0 0
        %770 = vmatmul.mubr.bf16.gmra.mrb[0].mxu0 %v637
        %v771 = vpop.f32.mrb[0].mxu0
        %v772 = vadd.f32 %v663, %v771
        %v773 = vpop.f32.mrb[0].mxu0
        %v774 = vpop.f32.mrb[0].mxu0
        %v775 = vadd.f32 %v663, %v774
        %v776 = vpop.f32.mrb[0].mxu0
        %777 = vmatprep.mubr.bf16.mxu0 0
        %778 = vmatmul.mubr.bf16.gmra.mrb[0].mxu0 %v638
        %v779 = vpop.f32.mrb[0].mxu0
        %v780 = vadd.f32 %v663, %v779
        %v781 = vpop.f32.mrb[0].mxu0
        %v782 = vpop.f32.mrb[0].mxu0
        %v783 = vadd.f32 %v663, %v782
        %v784 = vpop.f32.mrb[0].mxu0
        %785 = vmatprep.mubr.bf16.mxu0 0
        %786 = vmatmul.mubr.bf16.gmra.mrb[0].mxu0 %v639
        %v787 = vpop.f32.mrb[0].mxu0
        %v788 = vadd.f32 %v663, %v787
        %v789 = vpop.f32.mrb[0].mxu0
        %v790 = vpop.f32.mrb[0].mxu0
        %v791 = vadd.f32 %v663, %v790
        %v792 = vpop.f32.mrb[0].mxu0
        %793 = vmatprep.mubr.bf16.mxu0 0
        %794 = vmatmul.mubr.bf16.gmra.mrb[0].mxu0 %v640
        %v795 = vpop.f32.mrb[0].mxu0
        %v796 = vadd.f32 %v663, %v795
        %v797 = vpop.f32.mrb[0].mxu0
        %v798 = vpop.f32.mrb[0].mxu0
        %v799 = vadd.f32 %v663, %v798
        %v800 = vpop.f32.mrb[0].mxu0
        %801 = vmatprep.mubr.bf16.mxu0 0
        %802 = vmatmul.mubr.bf16.gmra.mrb[0].mxu0 %v641
        %v803 = vpop.f32.mrb[0].mxu0
        %v804 = vadd.f32 %v663, %v803
        %v805 = vpop.f32.mrb[0].mxu0
        %v806 = vpop.f32.mrb[0].mxu0
        %v807 = vadd.f32 %v663, %v806
        %v808 = vpop.f32.mrb[0].mxu0
        %809 = vdwg.mxu0
        %v810 = vmax.f32 %v748, 0.0
        %v811 = vmax.f32 %v751, 0.0
        %v812 = vmax.f32 %v756, 0.0
        %v813 = vmax.f32 %v759, 0.0
        %v814 = vmax.f32 %v764, 0.0
        %v815 = vmax.f32 %v767, 0.0
        %v816 = vmax.f32 %v772, 0.0
        %v817 = vmax.f32 %v775, 0.0
        %v818 = vmax.f32 %v780, 0.0
        %v819 = vmax.f32 %v783, 0.0
        %v820 = vmax.f32 %v788, 0.0
        %v821 = vmax.f32 %v791, 0.0
        %v822 = vmax.f32 %v796, 0.0
        %v823 = vmax.f32 %v799, 0.0
        %v824 = vmax.f32 %v804, 0.0
        %v825 = vmax.f32 %v807, 0.0
        %v826 = vpack.c.bf16 %v811, %v810
        %v827 = vpack.c.bf16 %v813, %v812
        %v828 = vpack.c.bf16 %v815, %v814
        %v829 = vpack.c.bf16 %v817, %v816
        %v830 = vpack.c.bf16 %v819, %v818
        %v831 = vpack.c.bf16 %v821, %v820
        %v832 = vpack.c.bf16 %v823, %v822
        %v833 = vpack.c.bf16 %v825, %v824
        %v834 = vld [vmem:[#allocation7] sm:$0xf]
        %v835 = vld [vmem:[#allocation7 + $0x4] sm:$0xf]
        %v836 = vld [vmem:[#allocation7 + $0x8] sm:$0xf]
        %v837 = vld [vmem:[#allocation7 + $0xc] sm:$0xf]
        %v838 = vld [vmem:[#allocation7 + $0x10] sm:$0xf]
        %v839 = vld [vmem:[#allocation7 + $0x14] sm:$0xf]
        %v840 = vld [vmem:[#allocation7 + $0x18] sm:$0xf]
        %v841 = vld [vmem:[#allocation7 + $0x1c] sm:$0xf]
        %v842 = vld [vmem:[#allocation7 + $0x20] sm:$0xf]
        %v843 = vld [vmem:[#allocation7 + $0x24] sm:$0xf]
        %v844 = vld [vmem:[#allocation7 + $0x28] sm:$0xf]
        %v845 = vld [vmem:[#allocation7 + $0x2c] sm:$0xf]
        %v846 = vld [vmem:[#allocation7 + $0x30] sm:$0xf]
        %v847 = vld [vmem:[#allocation7 + $0x34] sm:$0xf]
        %v848 = vld [vmem:[#allocation7 + $0x38] sm:$0xf]
        %v849 = vld [vmem:[#allocation7 + $0x3c] sm:$0xf]
        %v850 = vld [vmem:[%s4] sm:$0x1]
        %v852 = vlaneseq
        %v853 = vshrl.u32 %v852, 7
        %v854 = vsub.s32 0, %v853
        %v855 = vrot.slane %v850, %v854
        %v873 = vunpack.c.l.b16 %v834
        %v874 = vunpack.c.l.b16 %v835
        %v875 = vunpack.c.l.b16 %v836
        %v876 = vunpack.c.l.b16 %v837
        %v877 = vunpack.c.l.b16 %v838
        %v878 = vunpack.c.l.b16 %v839
        %v879 = vunpack.c.l.b16 %v840
        %v880 = vunpack.c.l.b16 %v841
        %v881 = vunpack.c.l.b16 %v842
        %v882 = vunpack.c.l.b16 %v843
        %v883 = vunpack.c.l.b16 %v844
        %v884 = vunpack.c.l.b16 %v845
        %v885 = vunpack.c.l.b16 %v846
        %v886 = vunpack.c.l.b16 %v847
        %v887 = vunpack.c.l.b16 %v848
        %v888 = vunpack.c.l.b16 %v849
        %v889 = vpack.c.b16 %v874, %v873
        %v890 = vpack.c.b16 %v876, %v875
        %v891 = vpack.c.b16 %v878, %v877
        %v892 = vpack.c.b16 %v880, %v879
        %v893 = vpack.c.b16 %v882, %v881
        %v894 = vpack.c.b16 %v884, %v883
        %v895 = vpack.c.b16 %v886, %v885
        %v896 = vpack.c.b16 %v888, %v887
        %905 = vmatprep.subr.bf16.mxu0 0
        %906 = vmatpush1.bf16.msra.mxu0 %v889
        %907 = vmatprep.subr.bf16.mxu0 0
        %908 = vmatpush1.bf16.msra.mxu0 %v890
        %909 = vmatprep.subr.bf16.mxu0 0
        %910 = vmatpush1.bf16.msra.mxu0 %v891
        %911 = vmatprep.subr.bf16.mxu0 0
        %912 = vmatpush1.bf16.msra.mxu0 %v892
        %913 = vmatprep.subr.bf16.mxu0 0
        %914 = vmatpush1.bf16.msra.mxu0 %v893
        %915 = vmatprep.subr.bf16.mxu0 0
        %916 = vmatpush1.bf16.msra.mxu0 %v894
        %917 = vmatprep.subr.bf16.mxu0 0
        %918 = vmatpush1.bf16.msra.mxu0 %v895
        %919 = vmatprep.subr.bf16.mxu0 0
        %920 = vmatpush1.bf16.msra.mxu0 %v896
        %921 = vmatprep.subr.bf16.mxu0 0
        %922 = vmatpush1.bf16.msra.mxu0 0
        %923 = vmatprep.subr.bf16.mxu0 0
        %924 = vmatpush1.bf16.msra.mxu0 0
        %925 = vmatprep.subr.bf16.mxu0 0
        %926 = vmatpush1.bf16.msra.mxu0 0
        %927 = vmatprep.subr.bf16.mxu0 0
        %928 = vmatpush1.bf16.msra.mxu0 0
        %929 = vmatprep.subr.bf16.mxu0 0
        %930 = vmatpush1.bf16.msra.mxu0 0
        %931 = vmatprep.subr.bf16.mxu0 0
        %932 = vmatpush1.bf16.msra.mxu0 0
        %933 = vmatprep.subr.bf16.mxu0 0
        %934 = vmatpush1.bf16.msra.mxu0 0
        %935 = vmatprep.subr.bf16.mxu0 0
        %936 = vmatpush1.bf16.msra.mxu0 0
        %937 = vmatprep.mubr.bf16.mxu0 0
        %938 = vmatmul.mubr.bf16.gmra.mrb[0].mxu0 %v826
        %v939 = vpop.f32.mrb[0].mxu0
        %v940 = vadd.f32 %v855, %v939
        %v941 = vpop.f32.mrb[0].mxu0
        %v942 = vpop.f32.mrb[0].mxu0
        %v943 = vadd.f32 %v855, %v942
        %v944 = vpop.f32.mrb[0].mxu0
        %945 = vmatprep.mubr.bf16.mxu0 0
        %946 = vmatmul.mubr.bf16.gmra.mrb[0].mxu0 %v827
        %v947 = vpop.f32.mrb[0].mxu0
        %v948 = vadd.f32 %v855, %v947
        %v949 = vpop.f32.mrb[0].mxu0
        %v950 = vpop.f32.mrb[0].mxu0
        %v951 = vadd.f32 %v855, %v950
        %v952 = vpop.f32.mrb[0].mxu0
        %953 = vmatprep.mubr.bf16.mxu0 0
        %954 = vmatmul.mubr.bf16.gmra.mrb[0].mxu0 %v828
        %v955 = vpop.f32.mrb[0].mxu0
        %v956 = vadd.f32 %v855, %v955
        %v957 = vpop.f32.mrb[0].mxu0
        %v958 = vpop.f32.mrb[0].mxu0
        %v959 = vadd.f32 %v855, %v958
        %v960 = vpop.f32.mrb[0].mxu0
        %961 = vmatprep.mubr.bf16.mxu0 0
        %962 = vmatmul.mubr.bf16.gmra.mrb[0].mxu0 %v829
        %v963 = vpop.f32.mrb[0].mxu0
        %v964 = vadd.f32 %v855, %v963
        %v965 = vpop.f32.mrb[0].mxu0
        %v966 = vpop.f32.mrb[0].mxu0
        %v967 = vadd.f32 %v855, %v966
        %v968 = vpop.f32.mrb[0].mxu0
        %969 = vmatprep.mubr.bf16.mxu0 0
        %970 = vmatmul.mubr.bf16.gmra.mrb[0].mxu0 %v830
        %v971 = vpop.f32.mrb[0].mxu0
        %v972 = vadd.f32 %v855, %v971
        %v973 = vpop.f32.mrb[0].mxu0
        %v974 = vpop.f32.mrb[0].mxu0
        %v975 = vadd.f32 %v855, %v974
        %v976 = vpop.f32.mrb[0].mxu0
        %977 = vmatprep.mubr.bf16.mxu0 0
        %978 = vmatmul.mubr.bf16.gmra.mrb[0].mxu0 %v831
        %v979 = vpop.f32.mrb[0].mxu0
        %v980 = vadd.f32 %v855, %v979
        %v981 = vpop.f32.mrb[0].mxu0
        %v982 = vpop.f32.mrb[0].mxu0
        %v983 = vadd.f32 %v855, %v982
        %v984 = vpop.f32.mrb[0].mxu0
        %985 = vmatprep.mubr.bf16.mxu0 0
        %986 = vmatmul.mubr.bf16.gmra.mrb[0].mxu0 %v832
        %v987 = vpop.f32.mrb[0].mxu0
        %v988 = vadd.f32 %v855, %v987
        %v989 = vpop.f32.mrb[0].mxu0
        %v990 = vpop.f32.mrb[0].mxu0
        %v991 = vadd.f32 %v855, %v990
        %v992 = vpop.f32.mrb[0].mxu0
        %993 = vmatprep.mubr.bf16.mxu0 0
        %994 = vmatmul.mubr.bf16.gmra.mrb[0].mxu0 %v833
        %v995 = vpop.f32.mrb[0].mxu0
        %v996 = vadd.f32 %v855, %v995
        %v997 = vpop.f32.mrb[0].mxu0
        %v998 = vpop.f32.mrb[0].mxu0
        %v999 = vadd.f32 %v855, %v998
        %v1000 = vpop.f32.mrb[0].mxu0
        %1001 = vdwg.mxu0
        %v1002 = vmax.f32 %v940, 0.0
        %v1003 = vmax.f32 %v943, 0.0
        %v1004 = vmax.f32 %v948, 0.0
        %v1005 = vmax.f32 %v951, 0.0
        %v1006 = vmax.f32 %v956, 0.0
        %v1007 = vmax.f32 %v959, 0.0
        %v1008 = vmax.f32 %v964, 0.0
        %v1009 = vmax.f32 %v967, 0.0
        %v1010 = vmax.f32 %v972, 0.0
        %v1011 = vmax.f32 %v975, 0.0
        %v1012 = vmax.f32 %v980, 0.0
        %v1013 = vmax.f32 %v983, 0.0
        %v1014 = vmax.f32 %v988, 0.0
        %v1015 = vmax.f32 %v991, 0.0
        %v1016 = vmax.f32 %v996, 0.0
        %v1017 = vmax.f32 %v999, 0.0
        %v1018 = vpack.c.bf16 %v1003, %v1002
        %v1019 = vpack.c.bf16 %v1005, %v1004
        %v1020 = vpack.c.bf16 %v1007, %v1006
        %v1021 = vpack.c.bf16 %v1009, %v1008
        %v1022 = vpack.c.bf16 %v1011, %v1010
        %v1023 = vpack.c.bf16 %v1013, %v1012
        %v1024 = vpack.c.bf16 %v1015, %v1014
        %v1025 = vpack.c.bf16 %v1017, %v1016
        %v1026 = vld [vmem:[#allocation8] sm:$0xf]
        %v1027 = vld [vmem:[#allocation8 + $0x4] sm:$0xf]
        %v1028 = vld [vmem:[#allocation8 + $0x8] sm:$0xf]
        %v1029 = vld [vmem:[#allocation8 + $0xc] sm:$0xf]
        %v1030 = vld [vmem:[#allocation8 + $0x10] sm:$0xf]
        %v1031 = vld [vmem:[#allocation8 + $0x14] sm:$0xf]
        %v1032 = vld [vmem:[#allocation8 + $0x18] sm:$0xf]
        %v1033 = vld [vmem:[#allocation8 + $0x1c] sm:$0xf]
        %v1034 = vld [vmem:[#allocation8 + $0x20] sm:$0xf]
        %v1035 = vld [vmem:[#allocation8 + $0x24] sm:$0xf]
        %v1036 = vld [vmem:[#allocation8 + $0x28] sm:$0xf]
        %v1037 = vld [vmem:[#allocation8 + $0x2c] sm:$0xf]
        %v1038 = vld [vmem:[#allocation8 + $0x30] sm:$0xf]
        %v1039 = vld [vmem:[#allocation8 + $0x34] sm:$0xf]
        %v1040 = vld [vmem:[#allocation8 + $0x38] sm:$0xf]
        %v1041 = vld [vmem:[#allocation8 + $0x3c] sm:$0xf]
        %v1042 = vld [vmem:[%s6] sm:$0x1]
        %v1044 = vlaneseq
        %v1045 = vshrl.u32 %v1044, 7
        %v1046 = vsub.s32 0, %v1045
        %v1047 = vrot.slane %v1042, %v1046
        %v1065 = vunpack.c.l.b16 %v1026
        %v1066 = vunpack.c.l.b16 %v1027
        %v1067 = vunpack.c.l.b16 %v1028
        %v1068 = vunpack.c.l.b16 %v1029
        %v1069 = vunpack.c.l.b16 %v1030
        %v1070 = vunpack.c.l.b16 %v1031
        %v1071 = vunpack.c.l.b16 %v1032
        %v1072 = vunpack.c.l.b16 %v1033
        %v1073 = vunpack.c.l.b16 %v1034
        %v1074 = vunpack.c.l.b16 %v1035
        %v1075 = vunpack.c.l.b16 %v1036
        %v1076 = vunpack.c.l.b16 %v1037
        %v1077 = vunpack.c.l.b16 %v1038
        %v1078 = vunpack.c.l.b16 %v1039
        %v1079 = vunpack.c.l.b16 %v1040
        %v1080 = vunpack.c.l.b16 %v1041
        %v1081 = vpack.c.b16 %v1066, %v1065
        %v1082 = vpack.c.b16 %v1068, %v1067
        %v1083 = vpack.c.b16 %v1070, %v1069
        %v1084 = vpack.c.b16 %v1072, %v1071
        %v1085 = vpack.c.b16 %v1074, %v1073
        %v1086 = vpack.c.b16 %v1076, %v1075
        %v1087 = vpack.c.b16 %v1078, %v1077
        %v1088 = vpack.c.b16 %v1080, %v1079
        %1097 = vmatprep.subr.bf16.mxu0 0
        %1098 = vmatpush1.bf16.msra.mxu0 %v1081
        %1099 = vmatprep.subr.bf16.mxu0 0
        %1100 = vmatpush1.bf16.msra.mxu0 %v1082
        %1101 = vmatprep.subr.bf16.mxu0 0
        %1102 = vmatpush1.bf16.msra.mxu0 %v1083
        %1103 = vmatprep.subr.bf16.mxu0 0
        %1104 = vmatpush1.bf16.msra.mxu0 %v1084
        %1105 = vmatprep.subr.bf16.mxu0 0
        %1106 = vmatpush1.bf16.msra.mxu0 %v1085
        %1107 = vmatprep.subr.bf16.mxu0 0
        %1108 = vmatpush1.bf16.msra.mxu0 %v1086
        %1109 = vmatprep.subr.bf16.mxu0 0
        %1110 = vmatpush1.bf16.msra.mxu0 %v1087
        %1111 = vmatprep.subr.bf16.mxu0 0
        %1112 = vmatpush1.bf16.msra.mxu0 %v1088
        %1113 = vmatprep.subr.bf16.mxu0 0
        %1114 = vmatpush1.bf16.msra.mxu0 0
        %1115 = vmatprep.subr.bf16.mxu0 0
        %1116 = vmatpush1.bf16.msra.mxu0 0
        %1117 = vmatprep.subr.bf16.mxu0 0
        %1118 = vmatpush1.bf16.msra.mxu0 0
        %1119 = vmatprep.subr.bf16.mxu0 0
        %1120 = vmatpush1.bf16.msra.mxu0 0
        %1121 = vmatprep.subr.bf16.mxu0 0
        %1122 = vmatpush1.bf16.msra.mxu0 0
        %1123 = vmatprep.subr.bf16.mxu0 0
        %1124 = vmatpush1.bf16.msra.mxu0 0
        %1125 = vmatprep.subr.bf16.mxu0 0
        %1126 = vmatpush1.bf16.msra.mxu0 0
        %1127 = vmatprep.subr.bf16.mxu0 0
        %1128 = vmatpush1.bf16.msra.mxu0 0
        %1129 = vmatprep.mubr.bf16.mxu0 0
        %1130 = vmatmul.mubr.bf16.gmra.mrb[0].mxu0 %v1018
        %v1131 = vpop.f32.mrb[0].mxu0
        %v1132 = vadd.f32 %v1047, %v1131
        %v1133 = vpop.f32.mrb[0].mxu0
        %v1134 = vpop.f32.mrb[0].mxu0
        %v1135 = vadd.f32 %v1047, %v1134
        %v1136 = vpop.f32.mrb[0].mxu0
        %1137 = vmatprep.mubr.bf16.mxu0 0
        %1138 = vmatmul.mubr.bf16.gmra.mrb[0].mxu0 %v1019
        %v1139 = vpop.f32.mrb[0].mxu0
        %v1140 = vadd.f32 %v1047, %v1139
        %v1141 = vpop.f32.mrb[0].mxu0
        %v1142 = vpop.f32.mrb[0].mxu0
        %v1143 = vadd.f32 %v1047, %v1142
        %v1144 = vpop.f32.mrb[0].mxu0
        %1145 = vmatprep.mubr.bf16.mxu0 0
        %1146 = vmatmul.mubr.bf16.gmra.mrb[0].mxu0 %v1020
        %v1147 = vpop.f32.mrb[0].mxu0
        %v1148 = vadd.f32 %v1047, %v1147
        %v1149 = vpop.f32.mrb[0].mxu0
        %v1150 = vpop.f32.mrb[0].mxu0
        %v1151 = vadd.f32 %v1047, %v1150
        %v1152 = vpop.f32.mrb[0].mxu0
        %1153 = vmatprep.mubr.bf16.mxu0 0
        %1154 = vmatmul.mubr.bf16.gmra.mrb[0].mxu0 %v1021
        %v1155 = vpop.f32.mrb[0].mxu0
        %v1156 = vadd.f32 %v1047, %v1155
        %v1157 = vpop.f32.mrb[0].mxu0
        %v1158 = vpop.f32.mrb[0].mxu0
        %v1159 = vadd.f32 %v1047, %v1158
        %v1160 = vpop.f32.mrb[0].mxu0
        %1161 = vmatprep.mubr.bf16.mxu0 0
        %1162 = vmatmul.mubr.bf16.gmra.mrb[0].mxu0 %v1022
        %v1163 = vpop.f32.mrb[0].mxu0
        %v1164 = vadd.f32 %v1047, %v1163
        %v1165 = vpop.f32.mrb[0].mxu0
        %v1166 = vpop.f32.mrb[0].mxu0
        %v1167 = vadd.f32 %v1047, %v1166
        %v1168 = vpop.f32.mrb[0].mxu0
        %1169 = vmatprep.mubr.bf16.mxu0 0
        %1170 = vmatmul.mubr.bf16.gmra.mrb[0].mxu0 %v1023
        %v1171 = vpop.f32.mrb[0].mxu0
        %v1172 = vadd.f32 %v1047, %v1171
        %v1173 = vpop.f32.mrb[0].mxu0
        %v1174 = vpop.f32.mrb[0].mxu0
        %v1175 = vadd.f32 %v1047, %v1174
        %v1176 = vpop.f32.mrb[0].mxu0
        %1177 = vmatprep.mubr.bf16.mxu0 0
        %1178 = vmatmul.mubr.bf16.gmra.mrb[0].mxu0 %v1024
        %v1179 = vpop.f32.mrb[0].mxu0
        %v1180 = vadd.f32 %v1047, %v1179
        %v1181 = vpop.f32.mrb[0].mxu0
        %v1182 = vpop.f32.mrb[0].mxu0
        %v1183 = vadd.f32 %v1047, %v1182
        %v1184 = vpop.f32.mrb[0].mxu0
        %1185 = vmatprep.mubr.bf16.mxu0 0
        %1186 = vmatmul.mubr.bf16.gmra.mrb[0].mxu0 %v1025
        %v1187 = vpop.f32.mrb[0].mxu0
        %v1188 = vadd.f32 %v1047, %v1187
        %v1189 = vpop.f32.mrb[0].mxu0
        %v1190 = vpop.f32.mrb[0].mxu0
        %v1191 = vadd.f32 %v1047, %v1190
        %v1192 = vpop.f32.mrb[0].mxu0
        %1193 = vdwg.mxu0
        %v1194 = vmax.f32 %v1132, 0.0
        %v1195 = vmax.f32 %v1135, 0.0
        %v1196 = vmax.f32 %v1140, 0.0
        %v1197 = vmax.f32 %v1143, 0.0
        %v1198 = vmax.f32 %v1148, 0.0
        %v1199 = vmax.f32 %v1151, 0.0
        %v1200 = vmax.f32 %v1156, 0.0
        %v1201 = vmax.f32 %v1159, 0.0
        %v1202 = vmax.f32 %v1164, 0.0
        %v1203 = vmax.f32 %v1167, 0.0
        %v1204 = vmax.f32 %v1172, 0.0
        %v1205 = vmax.f32 %v1175, 0.0
        %v1206 = vmax.f32 %v1180, 0.0
        %v1207 = vmax.f32 %v1183, 0.0
        %v1208 = vmax.f32 %v1188, 0.0
        %v1209 = vmax.f32 %v1191, 0.0
        %v1210 = vpack.c.bf16 %v1195, %v1194
        %v1211 = vpack.c.bf16 %v1197, %v1196
        %v1212 = vpack.c.bf16 %v1199, %v1198
        %v1213 = vpack.c.bf16 %v1201, %v1200
        %v1214 = vpack.c.bf16 %v1203, %v1202
        %v1215 = vpack.c.bf16 %v1205, %v1204
        %v1216 = vpack.c.bf16 %v1207, %v1206
        %v1217 = vpack.c.bf16 %v1209, %v1208
        %v1218 = vld [vmem:[#allocation10] sm:$0xf]
        %v1219 = vld [vmem:[#allocation10 + $0x4] sm:$0xf]
        %v1220 = vld [vmem:[#allocation10 + $0x8] sm:$0xf]
        %v1221 = vld [vmem:[#allocation10 + $0xc] sm:$0xf]
        %v1222 = vld [vmem:[#allocation10 + $0x10] sm:$0xf]
        %v1223 = vld [vmem:[#allocation10 + $0x14] sm:$0xf]
        %v1224 = vld [vmem:[#allocation10 + $0x18] sm:$0xf]
        %v1225 = vld [vmem:[#allocation10 + $0x1c] sm:$0xf]
        %v1226 = vld [vmem:[#allocation10 + $0x20] sm:$0xf]
        %v1227 = vld [vmem:[#allocation10 + $0x24] sm:$0xf]
        %v1228 = vld [vmem:[#allocation10 + $0x28] sm:$0xf]
        %v1229 = vld [vmem:[#allocation10 + $0x2c] sm:$0xf]
        %v1230 = vld [vmem:[#allocation10 + $0x30] sm:$0xf]
        %v1231 = vld [vmem:[#allocation10 + $0x34] sm:$0xf]
        %v1232 = vld [vmem:[#allocation10 + $0x38] sm:$0xf]
        %v1233 = vld [vmem:[#allocation10 + $0x3c] sm:$0xf]
        %v1234 = vld [vmem:[%s8] sm:$0x1]
        %v1236 = vlaneseq
        %v1237 = vshrl.u32 %v1236, 7
        %v1238 = vsub.s32 0, %v1237
        %v1239 = vrot.slane %v1234, %v1238
        %v1257 = vunpack.c.l.b16 %v1218
        %v1258 = vunpack.c.l.b16 %v1219
        %v1259 = vunpack.c.l.b16 %v1220
        %v1260 = vunpack.c.l.b16 %v1221
        %v1261 = vunpack.c.l.b16 %v1222
        %v1262 = vunpack.c.l.b16 %v1223
        %v1263 = vunpack.c.l.b16 %v1224
        %v1264 = vunpack.c.l.b16 %v1225
        %v1265 = vunpack.c.l.b16 %v1226
        %v1266 = vunpack.c.l.b16 %v1227
        %v1267 = vunpack.c.l.b16 %v1228
        %v1268 = vunpack.c.l.b16 %v1229
        %v1269 = vunpack.c.l.b16 %v1230
        %v1270 = vunpack.c.l.b16 %v1231
        %v1271 = vunpack.c.l.b16 %v1232
        %v1272 = vunpack.c.l.b16 %v1233
        %v1273 = vpack.c.b16 %v1258, %v1257
        %v1274 = vpack.c.b16 %v1260, %v1259
        %v1275 = vpack.c.b16 %v1262, %v1261
        %v1276 = vpack.c.b16 %v1264, %v1263
        %v1277 = vpack.c.b16 %v1266, %v1265
        %v1278 = vpack.c.b16 %v1268, %v1267
        %v1279 = vpack.c.b16 %v1270, %v1269
        %v1280 = vpack.c.b16 %v1272, %v1271
        %1289 = vmatprep.subr.bf16.mxu0 0
        %1290 = vmatpush1.bf16.msra.mxu0 %v1273
        %1291 = vmatprep.subr.bf16.mxu0 0
        %1292 = vmatpush1.bf16.msra.mxu0 %v1274
        %1293 = vmatprep.subr.bf16.mxu0 0
        %1294 = vmatpush1.bf16.msra.mxu0 %v1275
        %1295 = vmatprep.subr.bf16.mxu0 0
        %1296 = vmatpush1.bf16.msra.mxu0 %v1276
        %1297 = vmatprep.subr.bf16.mxu0 0
        %1298 = vmatpush1.bf16.msra.mxu0 %v1277
        %1299 = vmatprep.subr.bf16.mxu0 0
        %1300 = vmatpush1.bf16.msra.mxu0 %v1278
        %1301 = vmatprep.subr.bf16.mxu0 0
        %1302 = vmatpush1.bf16.msra.mxu0 %v1279
        %1303 = vmatprep.subr.bf16.mxu0 0
        %1304 = vmatpush1.bf16.msra.mxu0 %v1280
        %1305 = vmatprep.subr.bf16.mxu0 0
        %1306 = vmatpush1.bf16.msra.mxu0 0
        %1307 = vmatprep.subr.bf16.mxu0 0
        %1308 = vmatpush1.bf16.msra.mxu0 0
        %1309 = vmatprep.subr.bf16.mxu0 0
        %1310 = vmatpush1.bf16.msra.mxu0 0
        %1311 = vmatprep.subr.bf16.mxu0 0
        %1312 = vmatpush1.bf16.msra.mxu0 0
        %1313 = vmatprep.subr.bf16.mxu0 0
        %1314 = vmatpush1.bf16.msra.mxu0 0
        %1315 = vmatprep.subr.bf16.mxu0 0
        %1316 = vmatpush1.bf16.msra.mxu0 0
        %1317 = vmatprep.subr.bf16.mxu0 0
        %1318 = vmatpush1.bf16.msra.mxu0 0
        %1319 = vmatprep.subr.bf16.mxu0 0
        %1320 = vmatpush1.bf16.msra.mxu0 0
        %1321 = vmatprep.mubr.bf16.mxu0 0
        %1322 = vmatmul.mubr.bf16.gmra.mrb[0].mxu0 %v1210
        %v1323 = vpop.f32.mrb[0].mxu0
        %v1324 = vadd.f32 %v1239, %v1323
        %v1325 = vpop.f32.mrb[0].mxu0
        %v1326 = vpop.f32.mrb[0].mxu0
        %v1327 = vadd.f32 %v1239, %v1326
        %v1328 = vpop.f32.mrb[0].mxu0
        %1329 = vmatprep.mubr.bf16.mxu0 0
        %1330 = vmatmul.mubr.bf16.gmra.mrb[0].mxu0 %v1211
        %v1331 = vpop.f32.mrb[0].mxu0
        %v1332 = vadd.f32 %v1239, %v1331
        %v1333 = vpop.f32.mrb[0].mxu0
        %v1334 = vpop.f32.mrb[0].mxu0
        %v1335 = vadd.f32 %v1239, %v1334
        %v1336 = vpop.f32.mrb[0].mxu0
        %1337 = vmatprep.mubr.bf16.mxu0 0
        %1338 = vmatmul.mubr.bf16.gmra.mrb[0].mxu0 %v1212
        %v1339 = vpop.f32.mrb[0].mxu0
        %v1340 = vadd.f32 %v1239, %v1339
        %v1341 = vpop.f32.mrb[0].mxu0
        %v1342 = vpop.f32.mrb[0].mxu0
        %v1343 = vadd.f32 %v1239, %v1342
        %v1344 = vpop.f32.mrb[0].mxu0
        %1345 = vmatprep.mubr.bf16.mxu0 0
        %1346 = vmatmul.mubr.bf16.gmra.mrb[0].mxu0 %v1213
        %v1347 = vpop.f32.mrb[0].mxu0
        %v1348 = vadd.f32 %v1239, %v1347
        %v1349 = vpop.f32.mrb[0].mxu0
        %v1350 = vpop.f32.mrb[0].mxu0
        %v1351 = vadd.f32 %v1239, %v1350
        %v1352 = vpop.f32.mrb[0].mxu0
        %1353 = vmatprep.mubr.bf16.mxu0 0
        %1354 = vmatmul.mubr.bf16.gmra.mrb[0].mxu0 %v1214
        %v1355 = vpop.f32.mrb[0].mxu0
        %v1356 = vadd.f32 %v1239, %v1355
        %v1357 = vpop.f32.mrb[0].mxu0
        %v1358 = vpop.f32.mrb[0].mxu0
        %v1359 = vadd.f32 %v1239, %v1358
        %v1360 = vpop.f32.mrb[0].mxu0
        %1361 = vmatprep.mubr.bf16.mxu0 0
        %1362 = vmatmul.mubr.bf16.gmra.mrb[0].mxu0 %v1215
        %v1363 = vpop.f32.mrb[0].mxu0
        %v1364 = vadd.f32 %v1239, %v1363
        %v1365 = vpop.f32.mrb[0].mxu0
        %v1366 = vpop.f32.mrb[0].mxu0
        %v1367 = vadd.f32 %v1239, %v1366
        %v1368 = vpop.f32.mrb[0].mxu0
        %1369 = vmatprep.mubr.bf16.mxu0 0
        %1370 = vmatmul.mubr.bf16.gmra.mrb[0].mxu0 %v1216
        %v1371 = vpop.f32.mrb[0].mxu0
        %v1372 = vadd.f32 %v1239, %v1371
        %v1373 = vpop.f32.mrb[0].mxu0
        %v1374 = vpop.f32.mrb[0].mxu0
        %v1375 = vadd.f32 %v1239, %v1374
        %v1376 = vpop.f32.mrb[0].mxu0
        %1377 = vmatprep.mubr.bf16.mxu0 0
        %1378 = vmatmul.mubr.bf16.gmra.mrb[0].mxu0 %v1217
        %v1379 = vpop.f32.mrb[0].mxu0
        %v1380 = vadd.f32 %v1239, %v1379
        %v1381 = vpop.f32.mrb[0].mxu0
        %v1382 = vpop.f32.mrb[0].mxu0
        %v1383 = vadd.f32 %v1239, %v1382
        %v1384 = vpop.f32.mrb[0].mxu0
        %1385 = vdwg.mxu0
        %v1386 = vmax.f32 %v1324, 0.0
        %v1387 = vmax.f32 %v1327, 0.0
        %v1388 = vmax.f32 %v1332, 0.0
        %v1389 = vmax.f32 %v1335, 0.0
        %v1390 = vmax.f32 %v1340, 0.0
        %v1391 = vmax.f32 %v1343, 0.0
        %v1392 = vmax.f32 %v1348, 0.0
        %v1393 = vmax.f32 %v1351, 0.0
        %v1394 = vmax.f32 %v1356, 0.0
        %v1395 = vmax.f32 %v1359, 0.0
        %v1396 = vmax.f32 %v1364, 0.0
        %v1397 = vmax.f32 %v1367, 0.0
        %v1398 = vmax.f32 %v1372, 0.0
        %v1399 = vmax.f32 %v1375, 0.0
        %v1400 = vmax.f32 %v1380, 0.0
        %v1401 = vmax.f32 %v1383, 0.0
        %v1402 = vpack.c.bf16 %v1387, %v1386
        %v1403 = vpack.c.bf16 %v1389, %v1388
        %v1404 = vpack.c.bf16 %v1391, %v1390
        %v1405 = vpack.c.bf16 %v1393, %v1392
        %v1406 = vpack.c.bf16 %v1395, %v1394
        %v1407 = vpack.c.bf16 %v1397, %v1396
        %v1408 = vpack.c.bf16 %v1399, %v1398
        %v1409 = vpack.c.bf16 %v1401, %v1400
        %v1410 = vld [vmem:[#allocation11] sm:$0xf]
        %v1411 = vld [vmem:[#allocation11 + $0x4] sm:$0xf]
        %v1412 = vld [vmem:[#allocation11 + $0x8] sm:$0xf]
        %v1413 = vld [vmem:[#allocation11 + $0xc] sm:$0xf]
        %v1414 = vld [vmem:[#allocation11 + $0x10] sm:$0xf]
        %v1415 = vld [vmem:[#allocation11 + $0x14] sm:$0xf]
        %v1416 = vld [vmem:[#allocation11 + $0x18] sm:$0xf]
        %v1417 = vld [vmem:[#allocation11 + $0x1c] sm:$0xf]
        %v1418 = vld [vmem:[#allocation11 + $0x20] sm:$0xf]
        %v1419 = vld [vmem:[#allocation11 + $0x24] sm:$0xf]
        %v1420 = vld [vmem:[#allocation11 + $0x28] sm:$0xf]
        %v1421 = vld [vmem:[#allocation11 + $0x2c] sm:$0xf]
        %v1422 = vld [vmem:[#allocation11 + $0x30] sm:$0xf]
        %v1423 = vld [vmem:[#allocation11 + $0x34] sm:$0xf]
        %v1424 = vld [vmem:[#allocation11 + $0x38] sm:$0xf]
        %v1425 = vld [vmem:[#allocation11 + $0x3c] sm:$0xf]
        %v1426 = vld [vmem:[%s10] sm:$0x1]
        %v1428 = vlaneseq
        %v1429 = vshrl.u32 %v1428, 7
        %v1430 = vsub.s32 0, %v1429
        %v1431 = vrot.slane %v1426, %v1430
        %v1449 = vunpack.c.l.b16 %v1410
        %v1450 = vunpack.c.l.b16 %v1411
        %v1451 = vunpack.c.l.b16 %v1412
        %v1452 = vunpack.c.l.b16 %v1413
        %v1453 = vunpack.c.l.b16 %v1414
        %v1454 = vunpack.c.l.b16 %v1415
        %v1455 = vunpack.c.l.b16 %v1416
        %v1456 = vunpack.c.l.b16 %v1417
        %v1457 = vunpack.c.l.b16 %v1418
        %v1458 = vunpack.c.l.b16 %v1419
        %v1459 = vunpack.c.l.b16 %v1420
        %v1460 = vunpack.c.l.b16 %v1421
        %v1461 = vunpack.c.l.b16 %v1422
        %v1462 = vunpack.c.l.b16 %v1423
        %v1463 = vunpack.c.l.b16 %v1424
        %v1464 = vunpack.c.l.b16 %v1425
        %v1465 = vpack.c.b16 %v1450, %v1449
        %v1466 = vpack.c.b16 %v1452, %v1451
        %v1467 = vpack.c.b16 %v1454, %v1453
        %v1468 = vpack.c.b16 %v1456, %v1455
        %v1469 = vpack.c.b16 %v1458, %v1457
        %v1470 = vpack.c.b16 %v1460, %v1459
        %v1471 = vpack.c.b16 %v1462, %v1461
        %v1472 = vpack.c.b16 %v1464, %v1463
        %1481 = vmatprep.subr.bf16.mxu0 0
        %1482 = vmatpush1.bf16.msra.mxu0 %v1465
        %1483 = vmatprep.subr.bf16.mxu0 0
        %1484 = vmatpush1.bf16.msra.mxu0 %v1466
        %1485 = vmatprep.subr.bf16.mxu0 0
        %1486 = vmatpush1.bf16.msra.mxu0 %v1467
        %1487 = vmatprep.subr.bf16.mxu0 0
        %1488 = vmatpush1.bf16.msra.mxu0 %v1468
        %1489 = vmatprep.subr.bf16.mxu0 0
        %1490 = vmatpush1.bf16.msra.mxu0 %v1469
        %1491 = vmatprep.subr.bf16.mxu0 0
        %1492 = vmatpush1.bf16.msra.mxu0 %v1470
        %1493 = vmatprep.subr.bf16.mxu0 0
        %1494 = vmatpush1.bf16.msra.mxu0 %v1471
        %1495 = vmatprep.subr.bf16.mxu0 0
        %1496 = vmatpush1.bf16.msra.mxu0 %v1472
        %1497 = vmatprep.subr.bf16.mxu0 0
        %1498 = vmatpush1.bf16.msra.mxu0 0
        %1499 = vmatprep.subr.bf16.mxu0 0
        %1500 = vmatpush1.bf16.msra.mxu0 0
        %1501 = vmatprep.subr.bf16.mxu0 0
        %1502 = vmatpush1.bf16.msra.mxu0 0
        %1503 = vmatprep.subr.bf16.mxu0 0
        %1504 = vmatpush1.bf16.msra.mxu0 0
        %1505 = vmatprep.subr.bf16.mxu0 0
        %1506 = vmatpush1.bf16.msra.mxu0 0
        %1507 = vmatprep.subr.bf16.mxu0 0
        %1508 = vmatpush1.bf16.msra.mxu0 0
        %1509 = vmatprep.subr.bf16.mxu0 0
        %1510 = vmatpush1.bf16.msra.mxu0 0
        %1511 = vmatprep.subr.bf16.mxu0 0
        %1512 = vmatpush1.bf16.msra.mxu0 0
        %1513 = vmatprep.mubr.bf16.mxu0 0
        %1514 = vmatmul.mubr.bf16.gmra.mrb[0].mxu0 %v1402
        %v1515 = vpop.f32.mrb[0].mxu0
        %v1516 = vadd.f32 %v1431, %v1515
        %v1517 = vpop.f32.mrb[0].mxu0
        %v1518 = vpop.f32.mrb[0].mxu0
        %v1519 = vadd.f32 %v1431, %v1518
        %v1520 = vpop.f32.mrb[0].mxu0
        %1521 = vmatprep.mubr.bf16.mxu0 0
        %1522 = vmatmul.mubr.bf16.gmra.mrb[0].mxu0 %v1403
        %v1523 = vpop.f32.mrb[0].mxu0
        %v1524 = vadd.f32 %v1431, %v1523
        %v1525 = vpop.f32.mrb[0].mxu0
        %v1526 = vpop.f32.mrb[0].mxu0
        %v1527 = vadd.f32 %v1431, %v1526
        %v1528 = vpop.f32.mrb[0].mxu0
        %1529 = vmatprep.mubr.bf16.mxu0 0
        %1530 = vmatmul.mubr.bf16.gmra.mrb[0].mxu0 %v1404
        %v1531 = vpop.f32.mrb[0].mxu0
        %v1532 = vadd.f32 %v1431, %v1531
        %v1533 = vpop.f32.mrb[0].mxu0
        %v1534 = vpop.f32.mrb[0].mxu0
        %v1535 = vadd.f32 %v1431, %v1534
        %v1536 = vpop.f32.mrb[0].mxu0
        %1537 = vmatprep.mubr.bf16.mxu0 0
        %1538 = vmatmul.mubr.bf16.gmra.mrb[0].mxu0 %v1405
        %v1539 = vpop.f32.mrb[0].mxu0
        %v1540 = vadd.f32 %v1431, %v1539
        %v1541 = vpop.f32.mrb[0].mxu0
        %v1542 = vpop.f32.mrb[0].mxu0
        %v1543 = vadd.f32 %v1431, %v1542
        %v1544 = vpop.f32.mrb[0].mxu0
        %1545 = vmatprep.mubr.bf16.mxu0 0
        %1546 = vmatmul.mubr.bf16.gmra.mrb[0].mxu0 %v1406
        %v1547 = vpop.f32.mrb[0].mxu0
        %v1548 = vadd.f32 %v1431, %v1547
        %v1549 = vpop.f32.mrb[0].mxu0
        %v1550 = vpop.f32.mrb[0].mxu0
        %v1551 = vadd.f32 %v1431, %v1550
        %v1552 = vpop.f32.mrb[0].mxu0
        %1553 = vmatprep.mubr.bf16.mxu0 0
        %1554 = vmatmul.mubr.bf16.gmra.mrb[0].mxu0 %v1407
        %v1555 = vpop.f32.mrb[0].mxu0
        %v1556 = vadd.f32 %v1431, %v1555
        %v1557 = vpop.f32.mrb[0].mxu0
        %v1558 = vpop.f32.mrb[0].mxu0
        %v1559 = vadd.f32 %v1431, %v1558
        %v1560 = vpop.f32.mrb[0].mxu0
        %1561 = vmatprep.mubr.bf16.mxu0 0
        %1562 = vmatmul.mubr.bf16.gmra.mrb[0].mxu0 %v1408
        %v1563 = vpop.f32.mrb[0].mxu0
        %v1564 = vadd.f32 %v1431, %v1563
        %v1565 = vpop.f32.mrb[0].mxu0
        %v1566 = vpop.f32.mrb[0].mxu0
        %v1567 = vadd.f32 %v1431, %v1566
        %v1568 = vpop.f32.mrb[0].mxu0
        %1569 = vmatprep.mubr.bf16.mxu0 0
        %1570 = vmatmul.mubr.bf16.gmra.mrb[0].mxu0 %v1409
        %v1571 = vpop.f32.mrb[0].mxu0
        %v1572 = vadd.f32 %v1431, %v1571
        %v1573 = vpop.f32.mrb[0].mxu0
        %v1574 = vpop.f32.mrb[0].mxu0
        %v1575 = vadd.f32 %v1431, %v1574
        %v1576 = vpop.f32.mrb[0].mxu0
        %1577 = vdwg.mxu0
        %v1578 = vmax.f32 %v1516, 0.0
        %v1579 = vmax.f32 %v1519, 0.0
        %v1580 = vmax.f32 %v1524, 0.0
        %v1581 = vmax.f32 %v1527, 0.0
        %v1582 = vmax.f32 %v1532, 0.0
        %v1583 = vmax.f32 %v1535, 0.0
        %v1584 = vmax.f32 %v1540, 0.0
        %v1585 = vmax.f32 %v1543, 0.0
        %v1586 = vmax.f32 %v1548, 0.0
        %v1587 = vmax.f32 %v1551, 0.0
        %v1588 = vmax.f32 %v1556, 0.0
        %v1589 = vmax.f32 %v1559, 0.0
        %v1590 = vmax.f32 %v1564, 0.0
        %v1591 = vmax.f32 %v1567, 0.0
        %v1592 = vmax.f32 %v1572, 0.0
        %v1593 = vmax.f32 %v1575, 0.0
        %v1594 = vpack.c.bf16 %v1579, %v1578
        %v1595 = vpack.c.bf16 %v1581, %v1580
        %v1596 = vpack.c.bf16 %v1583, %v1582
        %v1597 = vpack.c.bf16 %v1585, %v1584
        %v1598 = vpack.c.bf16 %v1587, %v1586
        %v1599 = vpack.c.bf16 %v1589, %v1588
        %v1600 = vpack.c.bf16 %v1591, %v1590
        %v1601 = vpack.c.bf16 %v1593, %v1592
        %v1602 = vld [vmem:[#allocation13] sm:$0xf]
        %v1603 = vld [vmem:[#allocation13 + $0x4] sm:$0xf]
        %v1604 = vld [vmem:[#allocation13 + $0x8] sm:$0xf]
        %v1605 = vld [vmem:[#allocation13 + $0xc] sm:$0xf]
        %v1606 = vld [vmem:[#allocation13 + $0x10] sm:$0xf]
        %v1607 = vld [vmem:[#allocation13 + $0x14] sm:$0xf]
        %v1608 = vld [vmem:[#allocation13 + $0x18] sm:$0xf]
        %v1609 = vld [vmem:[#allocation13 + $0x1c] sm:$0xf]
        %v1610 = vld [vmem:[#allocation13 + $0x20] sm:$0xf]
        %v1611 = vld [vmem:[#allocation13 + $0x24] sm:$0xf]
        %v1612 = vld [vmem:[#allocation13 + $0x28] sm:$0xf]
        %v1613 = vld [vmem:[#allocation13 + $0x2c] sm:$0xf]
        %v1614 = vld [vmem:[#allocation13 + $0x30] sm:$0xf]
        %v1615 = vld [vmem:[#allocation13 + $0x34] sm:$0xf]
        %v1616 = vld [vmem:[#allocation13 + $0x38] sm:$0xf]
        %v1617 = vld [vmem:[#allocation13 + $0x3c] sm:$0xf]
        %v1618 = vld [vmem:[%s12] sm:$0x1]
        %v1620 = vlaneseq
        %v1621 = vshrl.u32 %v1620, 7
        %v1622 = vsub.s32 0, %v1621
        %v1623 = vrot.slane %v1618, %v1622
        %v1641 = vunpack.c.l.b16 %v1602
        %v1642 = vunpack.c.l.b16 %v1603
        %v1643 = vunpack.c.l.b16 %v1604
        %v1644 = vunpack.c.l.b16 %v1605
        %v1645 = vunpack.c.l.b16 %v1606
        %v1646 = vunpack.c.l.b16 %v1607
        %v1647 = vunpack.c.l.b16 %v1608
        %v1648 = vunpack.c.l.b16 %v1609
        %v1649 = vunpack.c.l.b16 %v1610
        %v1650 = vunpack.c.l.b16 %v1611
        %v1651 = vunpack.c.l.b16 %v1612
        %v1652 = vunpack.c.l.b16 %v1613
        %v1653 = vunpack.c.l.b16 %v1614
        %v1654 = vunpack.c.l.b16 %v1615
        %v1655 = vunpack.c.l.b16 %v1616
        %v1656 = vunpack.c.l.b16 %v1617
        %v1657 = vpack.c.b16 %v1642, %v1641
        %v1658 = vpack.c.b16 %v1644, %v1643
        %v1659 = vpack.c.b16 %v1646, %v1645
        %v1660 = vpack.c.b16 %v1648, %v1647
        %v1661 = vpack.c.b16 %v1650, %v1649
        %v1662 = vpack.c.b16 %v1652, %v1651
        %v1663 = vpack.c.b16 %v1654, %v1653
        %v1664 = vpack.c.b16 %v1656, %v1655
        %1673 = vmatprep.subr.bf16.mxu0 0
        %1674 = vmatpush1.bf16.msra.mxu0 %v1657
        %1675 = vmatprep.subr.bf16.mxu0 0
        %1676 = vmatpush1.bf16.msra.mxu0 %v1658
        %1677 = vmatprep.subr.bf16.mxu0 0
        %1678 = vmatpush1.bf16.msra.mxu0 %v1659
        %1679 = vmatprep.subr.bf16.mxu0 0
        %1680 = vmatpush1.bf16.msra.mxu0 %v1660
        %1681 = vmatprep.subr.bf16.mxu0 0
        %1682 = vmatpush1.bf16.msra.mxu0 %v1661
        %1683 = vmatprep.subr.bf16.mxu0 0
        %1684 = vmatpush1.bf16.msra.mxu0 %v1662
        %1685 = vmatprep.subr.bf16.mxu0 0
        %1686 = vmatpush1.bf16.msra.mxu0 %v1663
        %1687 = vmatprep.subr.bf16.mxu0 0
        %1688 = vmatpush1.bf16.msra.mxu0 %v1664
        %1689 = vmatprep.subr.bf16.mxu0 0
        %1690 = vmatpush1.bf16.msra.mxu0 0
        %1691 = vmatprep.subr.bf16.mxu0 0
        %1692 = vmatpush1.bf16.msra.mxu0 0
        %1693 = vmatprep.subr.bf16.mxu0 0
        %1694 = vmatpush1.bf16.msra.mxu0 0
        %1695 = vmatprep.subr.bf16.mxu0 0
        %1696 = vmatpush1.bf16.msra.mxu0 0
        %1697 = vmatprep.subr.bf16.mxu0 0
        %1698 = vmatpush1.bf16.msra.mxu0 0
        %1699 = vmatprep.subr.bf16.mxu0 0
        %1700 = vmatpush1.bf16.msra.mxu0 0
        %1701 = vmatprep.subr.bf16.mxu0 0
        %1702 = vmatpush1.bf16.msra.mxu0 0
        %1703 = vmatprep.subr.bf16.mxu0 0
        %1704 = vmatpush1.bf16.msra.mxu0 0
        %1705 = vmatprep.mubr.bf16.mxu0 0
        %1706 = vmatmul.mubr.bf16.gmra.mrb[0].mxu0 %v1594
        %v1707 = vpop.f32.mrb[0].mxu0
        %v1708 = vadd.f32 %v1623, %v1707
        %v1709 = vpop.f32.mrb[0].mxu0
        %v1710 = vpop.f32.mrb[0].mxu0
        %v1711 = vadd.f32 %v1623, %v1710
        %v1712 = vpop.f32.mrb[0].mxu0
        %1713 = vmatprep.mubr.bf16.mxu0 0
        %1714 = vmatmul.mubr.bf16.gmra.mrb[0].mxu0 %v1595
        %v1715 = vpop.f32.mrb[0].mxu0
        %v1716 = vadd.f32 %v1623, %v1715
        %v1717 = vpop.f32.mrb[0].mxu0
        %v1718 = vpop.f32.mrb[0].mxu0
        %v1719 = vadd.f32 %v1623, %v1718
        %v1720 = vpop.f32.mrb[0].mxu0
        %1721 = vmatprep.mubr.bf16.mxu0 0
        %1722 = vmatmul.mubr.bf16.gmra.mrb[0].mxu0 %v1596
        %v1723 = vpop.f32.mrb[0].mxu0
        %v1724 = vadd.f32 %v1623, %v1723
        %v1725 = vpop.f32.mrb[0].mxu0
        %v1726 = vpop.f32.mrb[0].mxu0
        %v1727 = vadd.f32 %v1623, %v1726
        %v1728 = vpop.f32.mrb[0].mxu0
        %1729 = vmatprep.mubr.bf16.mxu0 0
        %1730 = vmatmul.mubr.bf16.gmra.mrb[0].mxu0 %v1597
        %v1731 = vpop.f32.mrb[0].mxu0
        %v1732 = vadd.f32 %v1623, %v1731
        %v1733 = vpop.f32.mrb[0].mxu0
        %v1734 = vpop.f32.mrb[0].mxu0
        %v1735 = vadd.f32 %v1623, %v1734
        %v1736 = vpop.f32.mrb[0].mxu0
        %1737 = vmatprep.mubr.bf16.mxu0 0
        %1738 = vmatmul.mubr.bf16.gmra.mrb[0].mxu0 %v1598
        %v1739 = vpop.f32.mrb[0].mxu0
        %v1740 = vadd.f32 %v1623, %v1739
        %v1741 = vpop.f32.mrb[0].mxu0
        %v1742 = vpop.f32.mrb[0].mxu0
        %v1743 = vadd.f32 %v1623, %v1742
        %v1744 = vpop.f32.mrb[0].mxu0
        %1745 = vmatprep.mubr.bf16.mxu0 0
        %1746 = vmatmul.mubr.bf16.gmra.mrb[0].mxu0 %v1599
        %v1747 = vpop.f32.mrb[0].mxu0
        %v1748 = vadd.f32 %v1623, %v1747
        %v1749 = vpop.f32.mrb[0].mxu0
        %v1750 = vpop.f32.mrb[0].mxu0
        %v1751 = vadd.f32 %v1623, %v1750
        %v1752 = vpop.f32.mrb[0].mxu0
        %1753 = vmatprep.mubr.bf16.mxu0 0
        %1754 = vmatmul.mubr.bf16.gmra.mrb[0].mxu0 %v1600
        %v1755 = vpop.f32.mrb[0].mxu0
        %v1756 = vadd.f32 %v1623, %v1755
        %v1757 = vpop.f32.mrb[0].mxu0
        %v1758 = vpop.f32.mrb[0].mxu0
        %v1759 = vadd.f32 %v1623, %v1758
        %v1760 = vpop.f32.mrb[0].mxu0
        %1761 = vmatprep.mubr.bf16.mxu0 0
        %1762 = vmatmul.mubr.bf16.gmra.mrb[0].mxu0 %v1601
        %v1763 = vpop.f32.mrb[0].mxu0
        %v1764 = vadd.f32 %v1623, %v1763
        %v1765 = vpop.f32.mrb[0].mxu0
        %v1766 = vpop.f32.mrb[0].mxu0
        %v1767 = vadd.f32 %v1623, %v1766
        %v1768 = vpop.f32.mrb[0].mxu0
        %1769 = vdwg.mxu0
        %v1770 = vmax.f32 %v1708, 0.0
        %v1771 = vmax.f32 %v1711, 0.0
        %v1772 = vmax.f32 %v1716, 0.0
        %v1773 = vmax.f32 %v1719, 0.0
        %v1774 = vmax.f32 %v1724, 0.0
        %v1775 = vmax.f32 %v1727, 0.0
        %v1776 = vmax.f32 %v1732, 0.0
        %v1777 = vmax.f32 %v1735, 0.0
        %v1778 = vmax.f32 %v1740, 0.0
        %v1779 = vmax.f32 %v1743, 0.0
        %v1780 = vmax.f32 %v1748, 0.0
        %v1781 = vmax.f32 %v1751, 0.0
        %v1782 = vmax.f32 %v1756, 0.0
        %v1783 = vmax.f32 %v1759, 0.0
        %v1784 = vmax.f32 %v1764, 0.0
        %v1785 = vmax.f32 %v1767, 0.0
        %v1786 = vpack.c.bf16 %v1771, %v1770
        %v1787 = vpack.c.bf16 %v1773, %v1772
        %v1788 = vpack.c.bf16 %v1775, %v1774
        %v1789 = vpack.c.bf16 %v1777, %v1776
        %v1790 = vpack.c.bf16 %v1779, %v1778
        %v1791 = vpack.c.bf16 %v1781, %v1780
        %v1792 = vpack.c.bf16 %v1783, %v1782
        %v1793 = vpack.c.bf16 %v1785, %v1784
        %v1794 = vld [vmem:[#allocation14] sm:$0xf]
        %v1795 = vld [vmem:[#allocation14 + $0x4] sm:$0xf]
        %v1796 = vld [vmem:[#allocation14 + $0x8] sm:$0xf]
        %v1797 = vld [vmem:[#allocation14 + $0xc] sm:$0xf]
        %v1798 = vld [vmem:[#allocation14 + $0x10] sm:$0xf]
        %v1799 = vld [vmem:[#allocation14 + $0x14] sm:$0xf]
        %v1800 = vld [vmem:[#allocation14 + $0x18] sm:$0xf]
        %v1801 = vld [vmem:[#allocation14 + $0x1c] sm:$0xf]
        %v1802 = vld [vmem:[#allocation14 + $0x20] sm:$0xf]
        %v1803 = vld [vmem:[#allocation14 + $0x24] sm:$0xf]
        %v1804 = vld [vmem:[#allocation14 + $0x28] sm:$0xf]
        %v1805 = vld [vmem:[#allocation14 + $0x2c] sm:$0xf]
        %v1806 = vld [vmem:[#allocation14 + $0x30] sm:$0xf]
        %v1807 = vld [vmem:[#allocation14 + $0x34] sm:$0xf]
        %v1808 = vld [vmem:[#allocation14 + $0x38] sm:$0xf]
        %v1809 = vld [vmem:[#allocation14 + $0x3c] sm:$0xf]
        %v1810 = vld [vmem:[%s14] sm:$0x1]
        %v1812 = vlaneseq
        %v1813 = vshrl.u32 %v1812, 7
        %v1814 = vsub.s32 0, %v1813
        %v1815 = vrot.slane %v1810, %v1814
        %v1833 = vunpack.c.l.b16 %v1794
        %v1834 = vunpack.c.l.b16 %v1795
        %v1835 = vunpack.c.l.b16 %v1796
        %v1836 = vunpack.c.l.b16 %v1797
        %v1837 = vunpack.c.l.b16 %v1798
        %v1838 = vunpack.c.l.b16 %v1799
        %v1839 = vunpack.c.l.b16 %v1800
        %v1840 = vunpack.c.l.b16 %v1801
        %v1841 = vunpack.c.l.b16 %v1802
        %v1842 = vunpack.c.l.b16 %v1803
        %v1843 = vunpack.c.l.b16 %v1804
        %v1844 = vunpack.c.l.b16 %v1805
        %v1845 = vunpack.c.l.b16 %v1806
        %v1846 = vunpack.c.l.b16 %v1807
        %v1847 = vunpack.c.l.b16 %v1808
        %v1848 = vunpack.c.l.b16 %v1809
        %v1849 = vpack.c.b16 %v1834, %v1833
        %v1850 = vpack.c.b16 %v1836, %v1835
        %v1851 = vpack.c.b16 %v1838, %v1837
        %v1852 = vpack.c.b16 %v1840, %v1839
        %v1853 = vpack.c.b16 %v1842, %v1841
        %v1854 = vpack.c.b16 %v1844, %v1843
        %v1855 = vpack.c.b16 %v1846, %v1845
        %v1856 = vpack.c.b16 %v1848, %v1847
        %1865 = vmatprep.subr.bf16.mxu0 0
        %1866 = vmatpush1.bf16.msra.mxu0 %v1849
        %1867 = vmatprep.subr.bf16.mxu0 0
        %1868 = vmatpush1.bf16.msra.mxu0 %v1850
        %1869 = vmatprep.subr.bf16.mxu0 0
        %1870 = vmatpush1.bf16.msra.mxu0 %v1851
        %1871 = vmatprep.subr.bf16.mxu0 0
        %1872 = vmatpush1.bf16.msra.mxu0 %v1852
        %1873 = vmatprep.subr.bf16.mxu0 0
        %1874 = vmatpush1.bf16.msra.mxu0 %v1853
        %1875 = vmatprep.subr.bf16.mxu0 0
        %1876 = vmatpush1.bf16.msra.mxu0 %v1854
        %1877 = vmatprep.subr.bf16.mxu0 0
        %1878 = vmatpush1.bf16.msra.mxu0 %v1855
        %1879 = vmatprep.subr.bf16.mxu0 0
        %1880 = vmatpush1.bf16.msra.mxu0 %v1856
        %1881 = vmatprep.subr.bf16.mxu0 0
        %1882 = vmatpush1.bf16.msra.mxu0 0
        %1883 = vmatprep.subr.bf16.mxu0 0
        %1884 = vmatpush1.bf16.msra.mxu0 0
        %1885 = vmatprep.subr.bf16.mxu0 0
        %1886 = vmatpush1.bf16.msra.mxu0 0
        %1887 = vmatprep.subr.bf16.mxu0 0
        %1888 = vmatpush1.bf16.msra.mxu0 0
        %1889 = vmatprep.subr.bf16.mxu0 0
        %1890 = vmatpush1.bf16.msra.mxu0 0
        %1891 = vmatprep.subr.bf16.mxu0 0
        %1892 = vmatpush1.bf16.msra.mxu0 0
        %1893 = vmatprep.subr.bf16.mxu0 0
        %1894 = vmatpush1.bf16.msra.mxu0 0
        %1895 = vmatprep.subr.bf16.mxu0 0
        %1896 = vmatpush1.bf16.msra.mxu0 0
        %1897 = vmatprep.mubr.bf16.mxu0 0
        %1898 = vmatmul.mubr.bf16.gmra.mrb[0].mxu0 %v1786
        %v1899 = vpop.f32.mrb[0].mxu0
        %v1900 = vadd.f32 %v1815, %v1899
        %v1901 = vpop.f32.mrb[0].mxu0
        %v1902 = vpop.f32.mrb[0].mxu0
        %v1903 = vadd.f32 %v1815, %v1902
        %v1904 = vpop.f32.mrb[0].mxu0
        %1905 = vmatprep.mubr.bf16.mxu0 0
        %1906 = vmatmul.mubr.bf16.gmra.mrb[0].mxu0 %v1787
        %v1907 = vpop.f32.mrb[0].mxu0
        %v1908 = vadd.f32 %v1815, %v1907
        %v1909 = vpop.f32.mrb[0].mxu0
        %v1910 = vpop.f32.mrb[0].mxu0
        %v1911 = vadd.f32 %v1815, %v1910
        %v1912 = vpop.f32.mrb[0].mxu0
        %1913 = vmatprep.mubr.bf16.mxu0 0
        %1914 = vmatmul.mubr.bf16.gmra.mrb[0].mxu0 %v1788
        %v1915 = vpop.f32.mrb[0].mxu0
        %v1916 = vadd.f32 %v1815, %v1915
        %v1917 = vpop.f32.mrb[0].mxu0
        %v1918 = vpop.f32.mrb[0].mxu0
        %v1919 = vadd.f32 %v1815, %v1918
        %v1920 = vpop.f32.mrb[0].mxu0
        %1921 = vmatprep.mubr.bf16.mxu0 0
        %1922 = vmatmul.mubr.bf16.gmra.mrb[0].mxu0 %v1789
        %v1923 = vpop.f32.mrb[0].mxu0
        %v1924 = vadd.f32 %v1815, %v1923
        %v1925 = vpop.f32.mrb[0].mxu0
        %v1926 = vpop.f32.mrb[0].mxu0
        %v1927 = vadd.f32 %v1815, %v1926
        %v1928 = vpop.f32.mrb[0].mxu0
        %1929 = vmatprep.mubr.bf16.mxu0 0
        %1930 = vmatmul.mubr.bf16.gmra.mrb[0].mxu0 %v1790
        %v1931 = vpop.f32.mrb[0].mxu0
        %v1932 = vadd.f32 %v1815, %v1931
        %v1933 = vpop.f32.mrb[0].mxu0
        %v1934 = vpop.f32.mrb[0].mxu0
        %v1935 = vadd.f32 %v1815, %v1934
        %v1936 = vpop.f32.mrb[0].mxu0
        %1937 = vmatprep.mubr.bf16.mxu0 0
        %1938 = vmatmul.mubr.bf16.gmra.mrb[0].mxu0 %v1791
        %v1939 = vpop.f32.mrb[0].mxu0
        %v1940 = vadd.f32 %v1815, %v1939
        %v1941 = vpop.f32.mrb[0].mxu0
        %v1942 = vpop.f32.mrb[0].mxu0
        %v1943 = vadd.f32 %v1815, %v1942
        %v1944 = vpop.f32.mrb[0].mxu0
        %1945 = vmatprep.mubr.bf16.mxu0 0
        %1946 = vmatmul.mubr.bf16.gmra.mrb[0].mxu0 %v1792
        %v1947 = vpop.f32.mrb[0].mxu0
        %v1948 = vadd.f32 %v1815, %v1947
        %v1949 = vpop.f32.mrb[0].mxu0
        %v1950 = vpop.f32.mrb[0].mxu0
        %v1951 = vadd.f32 %v1815, %v1950
        %v1952 = vpop.f32.mrb[0].mxu0
        %1953 = vmatprep.mubr.bf16.mxu0 0
        %1954 = vmatmul.mubr.bf16.gmra.mrb[0].mxu0 %v1793
        %v1955 = vpop.f32.mrb[0].mxu0
        %v1956 = vadd.f32 %v1815, %v1955
        %v1957 = vpop.f32.mrb[0].mxu0
        %v1958 = vpop.f32.mrb[0].mxu0
        %v1959 = vadd.f32 %v1815, %v1958
        %v1960 = vpop.f32.mrb[0].mxu0
        %1961 = vdwg.mxu0
        %1962 = vst [vmem:[%s614] sm:$0xff] %v1900
        %1963 = vst [vmem:[%s614 + $0x8] sm:$0xff] %v1903
        %1964 = vst [vmem:[%s614 + $0x10] sm:$0xff] %v1908
        %1965 = vst [vmem:[%s614 + $0x18] sm:$0xff] %v1911
        %1966 = vst [vmem:[%s614 + $0x20] sm:$0xff] %v1916
        %1967 = vst [vmem:[%s614 + $0x28] sm:$0xff] %v1919
        %1968 = vst [vmem:[%s614 + $0x30] sm:$0xff] %v1924
        %1969 = vst [vmem:[%s614 + $0x38] sm:$0xff] %v1927
        %1970 = vst [vmem:[%s614 + $0x40] sm:$0xff] %v1932
        %1971 = vst [vmem:[%s614 + $0x48] sm:$0xff] %v1935
        %1972 = vst [vmem:[%s614 + $0x50] sm:$0xff] %v1940
        %1973 = vst [vmem:[%s614 + $0x58] sm:$0xff] %v1943
        %1974 = vst [vmem:[%s614 + $0x60] sm:$0xff] %v1948
        %1975 = vst [vmem:[%s614 + $0x68] sm:$0xff] %v1951
        %1976 = vst [vmem:[%s614 + $0x70] sm:$0xff] %v1956
        %1977 = vst [vmem:[%s614 + $0x78] sm:$0xff] %v1959
        %s1978 = sand.u32 %s364, 1
        %s1979 = scalar_lea.sflag [#allocation4], %s1978
        %s1980 = sand.u32 %s364, 1
        %s1981 = smul.addr %s1980, 128
        %s1982 = scalar_lea.vmem [#allocation16], %s1981
        // Predicated region
        $region113: #{tpu_custom_call.1} parent=79 // pred_check
          %p1983 = pneg %p374
        $region114: #{tpu_custom_call.1} parent=79 // pred_check_branch
          %1985 = sbr.rel (%p1983) target = $region116
        $region115: #{tpu_custom_call.1} parent=79 // pred_region
          %s1986 = smul.u32 16, %s36
          %s1988 = ssub.s32 2048, 2048
          %1989 = vsyncadd %s1979, %s1988
          %s1990 = smul.addr %s1986, 128
          %s1991 = scalar_lea.hbm %s15, %s1990
          %s1992 = sshll.u32 %s1982, 4
          %s1993 = int_to_ptr.vmem [resolvable:$true] %s1992
          %1998 = dma.vmem_to_hbm [thread:$0]  %s1993, 2048, %s1991, %s1979, 128, 128, 8
        $region116: #{tpu_custom_call.1} parent=79 // pred_fallthru
          _
      $region80: #{tpu_custom_call.1} parent=5 // pred_fallthru
        _
      %p1999 = scmp.le.s32.totalorder 2, %s31
      // Predicated region
      $region117: #{tpu_custom_call.1} parent=5 // pred_check
        %p2000 = pneg %p1999
      $region118: #{tpu_custom_call.1} parent=5 // pred_check_branch
        %2002 = sbr.rel (%p2000) target = $region120
      $region119: #{tpu_custom_call.1} parent=5 // pred_region
        %s2003 = ssub.s32 %s31, 2
        // Predicated region
        $region121: #{tpu_custom_call.1} parent=119 // pred_check
          %p2004 = pneg %p380
        $region122: #{tpu_custom_call.1} parent=119 // pred_check_branch
          %2006 = sbr.rel (%p2004) target = $region124
        $region123: #{tpu_custom_call.1} parent=119 // pred_region
          %s2007 = sand.u32 %s365, 1
          %s2008 = scalar_lea.sflag [#allocation4], %s2007
          %s2009 = sand.u32 %s365, 1
          %s2010 = smul.addr %s2009, 128
          %s2011 = scalar_lea.vmem [#allocation16], %s2010
          %2012 = dma.done %s2008, 2048
        $region124: #{tpu_custom_call.1} parent=119 // pred_fallthru
          _
      $region120: #{tpu_custom_call.1} parent=5 // pred_fallthru
        _
    $region6: #{tpu_custom_call.1} parent=1 // loop_footer
      %s35 = sadd.s32 1, %s31
    $region7: #{tpu_custom_call.1} parent=1 // loop_footer_branch
      %30 = sbr.rel target = $region3
    $region8: #{tpu_custom_call.1} parent=1 // loop_exit
      _
    %2013 = vsyncpa [#allocation3], 1
    %s2014 = scalar_lea.sflag [#allocation3], 1
    %2015 = vsyncpa %s2014, 1
    %2016 = vsyncpa [#allocation6], 1
    %2017 = vsyncpa [#allocation9], 1
    %2018 = vsyncpa [#allocation12], 1
    %2019 = vsyncpa [#allocation15], 1
    %2020 = vsyncpa [#allocation4], 1
    %s2021 = scalar_lea.sflag [#allocation4], 1
    %2022 = vsyncpa %s2021, 1

</llo_original>
